<compile_context>
chip_gen: v5e
topology: v5e:2x2
jax: 0.10.0
libtpu: 0.0.40
codegen_flags: <defaults>
</compile_context>

<pallas_src>
import jax
import jax.numpy as jnp
from jax import lax
from jax.experimental import pallas as pl
from jax.experimental.pallas import tpu as pltpu

LN_EPS = 1e-5  # PyTorch nn.LayerNorm default


def xlstm_cell_kernel(x_ref, w4_ref, b4_ref, eg_ref, gamma_ref, beta_ref, o_ref):
    H = o_ref.shape[-1]
    x = x_ref[...].astype(jnp.bfloat16)  # MXU-native bf16 path, fp32 accumulate

    def gate_pre(g):
        # Static, 128-lane-aligned slice of the fused weight/bias (no VMEM copy).
        pre = jnp.dot(x, w4_ref[:, g * H:(g + 1) * H],
                      preferred_element_type=jnp.float32)
        return pre + b4_ref[:, g * H:(g + 1) * H]

    # Gate order along the 4H axis: [forget, input, candidate, output].
    # Each nonlinearity is applied right after its matmul so the peak live set
    # stays ~2-3 (tm, H) fp32 arrays instead of a full (tm, 4H) z.
    forget = jax.nn.sigmoid(gate_pre(0))
    input_g = jax.nn.sigmoid(gate_pre(1))
    exp_factor = jnp.exp(eg_ref[...] * input_g)          # input_g dead after this
    candidate = jnp.tanh(gate_pre(2))
    cell_state = forget * candidate * exp_factor          # forget/candidate dead
    output = jax.nn.sigmoid(gate_pre(3))
    hidden = output * jnp.tanh(cell_state)                # (tm, H) fp32

    # LayerNorm over the full hidden dim (two-pass variance: numerically safe,
    # and the XLU reductions have slack in this kernel).
    mean = jnp.mean(hidden, axis=-1, keepdims=True)
    centered = hidden - mean
    var = jnp.mean(centered * centered, axis=-1, keepdims=True)
    inv_std = lax.rsqrt(jnp.maximum(var, 0.0) + LN_EPS)
    out = centered * inv_std * gamma_ref[...] + beta_ref[...]

    o_ref[...] = out.astype(o_ref.dtype)


def _pick_batch_tile(batch):
    """Batch tile <= 128 (larger buys nothing on the MXU and costs VMEM).
    Prefer a tile that yields an EVEN grid length >= 2 so v7x's two
    TensorCores get a balanced share of the batch tiles."""
    candidates = (128, 64, 32, 16, 8)
    for tm in candidates:
        if batch % tm == 0 and (batch // tm) % 2 == 0:
            return tm
    for tm in candidates:
        if batch % tm == 0:
            return tm
    return batch  # small / ragged batch: one full-batch block


def xlstm_cell_forward(x, params):
    """x: (B, H) float32 or bfloat16.  params: dict from init_params."""
    B, H = x.shape
    w4, b4 = params["w4"], params["b4"]
    eg, gamma, beta = params["exp_gate"], params["ln_gamma"], params["ln_beta"]
    assert w4.shape == (H, 4 * H) and b4.shape == (1, 4 * H)
    # Per-gate weight/bias slices in-kernel are only free when they land on
    # 128-lane tile boundaries; pad the hidden dim upstream if needed.
    assert H % 128 == 0, "hidden_size must be a multiple of 128"

    tm = _pick_batch_tile(B)
    grid = (pl.cdiv(B, tm),)

    resident = lambda i: (0, 0)   # constant index_map -> stays VMEM-resident
    single = pl.Buffered(1)       # resident params need no double buffering
    in_specs = [
        pl.BlockSpec((tm, H), lambda i: (i, 0)),                    # x (pipelined)
        pl.BlockSpec((H, 4 * H), resident, pipeline_mode=single),   # fused bf16 W
        pl.BlockSpec((1, 4 * H), resident, pipeline_mode=single),   # fused bias
        pl.BlockSpec((1, H), resident, pipeline_mode=single),       # exp_gate
        pl.BlockSpec((1, H), resident, pipeline_mode=single),       # ln gamma
        pl.BlockSpec((1, H), resident, pipeline_mode=single),       # ln beta
    ]
    out_specs = pl.BlockSpec((tm, H), lambda i: (i, 0))

    # VMEM budget: single-buffered resident params + double-buffered x/out
    # tiles + fp32 in-kernel intermediates, ~30% headroom, capped at 64 MiB
    # (v7x physical per-TC VMEM; v5e/v6e have 128 MiB so the cap is safe).
    x_bytes = jnp.dtype(x.dtype).itemsize
    resident_bytes = (w4.size * jnp.dtype(w4.dtype).itemsize
                      + (b4.size + eg.size + gamma.size + beta.size) * 4)
    io_bytes = 2 * tm * H * x_bytes * 2          # x + out, 2 pipeline buffers each
    live_bytes = 6 * tm * H * 4                  # fp32 gate intermediates
    budget = int(1.3 * (resident_bytes + io_bytes + live_bytes))
    vmem_limit = min(max(budget, 16 * 1024 * 1024), 64 * 1024 * 1024)

    cost = pl.CostEstimate(
        flops=2 * B * H * 4 * H,
        transcendentals=6 * B * H,  # 3 sigmoid + 2 tanh + 1 exp per element
        bytes_accessed=(resident_bytes + 2 * B * H * x_bytes),
    )

    return pl.pallas_call(
        xlstm_cell_kernel,
        out_shape=jax.ShapeDtypeStruct((B, H), x.dtype),
        grid=grid,
        in_specs=in_specs,
        out_specs=out_specs,
        compiler_params=pltpu.CompilerParams(
            # Batch tiles are independent -> v7x shards them across both TCs.
            # Note: for very small B the kernel is weight-BW-bound and each TC
            # streams its own weight copy; verify with a trace whether
            # "arbitrary" (single core) wins in that regime.
            dimension_semantics=("parallel",),
            vmem_limit_bytes=vmem_limit,
        ),
        cost_estimate=cost,
    )(x, w4, b4, eg, gamma, beta)


def init_params(key, hidden_size):
    """Deterministic synthetic parameters matching xLSTMCell.__init__ shapes,
    packed into the fused layout used by the kernel."""
    ks = jax.random.split(key, 8)
    scale = 1.0 / jnp.sqrt(hidden_size)

    def lin(kw, kb):
        # Stored already transposed to (H_in, H_out); x @ w == PyTorch x @ W.T.
        w = jax.random.uniform(kw, (hidden_size, hidden_size),
                               jnp.float32, -scale, scale)
        b = jax.random.uniform(kb, (hidden_size,), jnp.float32, -scale, scale)
        return w, b

    wf, bf = lin(ks[0], ks[1])
    wi, bi = lin(ks[2], ks[3])
    wc, bc = lin(ks[4], ks[5])
    wo, bo = lin(ks[6], ks[7])

    # Fused packing: one (H, 4H) bf16 weight, one (1, 4H) f32 bias.
    # Gate order: [forget, input, candidate, output].
    w4 = jnp.concatenate([wf, wi, wc, wo], axis=1).astype(jnp.bfloat16)
    b4 = jnp.concatenate([bf, bi, bc, bo], axis=0).reshape(1, 4 * hidden_size)

    return {
        "w4": w4, "b4": b4,
        "exp_gate": jnp.full((1, hidden_size), 0.1, jnp.float32),
        "ln_gamma": jnp.ones((1, hidden_size), jnp.float32),
        "ln_beta": jnp.zeros((1, hidden_size), jnp.float32),
    }


def xlstm_cell_ref(x, p):
    """Pure-JAX reference mirroring the PyTorch forward (same bf16 weights)."""
    H = x.shape[-1]
    z = jnp.dot(x.astype(jnp.bfloat16), p["w4"],
                preferred_element_type=jnp.float32) + p["b4"]
    forget = jax.nn.sigmoid(z[:, 0 * H:1 * H])
    input_g = jax.nn.sigmoid(z[:, 1 * H:2 * H])
    candidate = jnp.tanh(z[:, 2 * H:3 * H])
    output = jax.nn.sigmoid(z[:, 3 * H:4 * H])
    exp_factor = jnp.exp(p["exp_gate"] * input_g)
    cell_state = forget * candidate * exp_factor
    hidden = output * jnp.tanh(cell_state)
    mean = jnp.mean(hidden, axis=-1, keepdims=True)
    var = jnp.mean((hidden - mean) ** 2, axis=-1, keepdims=True)
    normed = (hidden - mean) * lax.rsqrt(var + LN_EPS)
    return normed * p["ln_gamma"] + p["ln_beta"]


if __name__ == "__main__":
    B, H = 128, 128   # lane-aligned small shapes; tm=64 -> even grid of 2 tiles
    key = jax.random.PRNGKey(0)
    kx, kp = jax.random.split(key)
    x = jax.random.normal(kx, (B, H), jnp.float32)
    params = init_params(kp, H)

    out = jax.block_until_ready(xlstm_cell_forward(x, params))
    ref = xlstm_cell_ref(x, params)

    assert out.shape == (B, H)
    max_err = jnp.max(jnp.abs(out - ref))
    assert jnp.allclose(out, ref, atol=2e-3, rtol=2e-3), f"max abs err {max_err}"
    print("KERNEL_OK")
</pallas_src>

<mosaic_0001>
module attributes {stable_mosaic.version = 11 : i64} {
  func.func @xlstm_cell_kernel(%arg0: i32, %arg1: memref<64x128xf32, #tpu.memory_space<vmem>>, %arg2: memref<128x512xbf16, #tpu.memory_space<vmem>>, %arg3: memref<1x512xf32, #tpu.memory_space<vmem>>, %arg4: memref<1x128xf32, #tpu.memory_space<vmem>>, %arg5: memref<1x128xf32, #tpu.memory_space<vmem>>, %arg6: memref<1x128xf32, #tpu.memory_space<vmem>>, %arg7: memref<64x128xf32, #tpu.memory_space<vmem>>) attributes {dimension_semantics = [#tpu.dimension_semantics<parallel>], iteration_bounds = array<i64: 2>, scalar_prefetch = 0 : i64, scratch_operands = 0 : i64, tpu.core_type = #tpu.core_type<tc>, window_params = [{transform_indices = @transform_0, window_bounds = array<i64: 64, 128>}, {pipeline_mode = #tpu.pipeline_mode<synchronous>, transform_indices = @transform_1, window_bounds = array<i64: 128, 512>}, {pipeline_mode = #tpu.pipeline_mode<synchronous>, transform_indices = @transform_2, window_bounds = array<i64: 1, 512>}, {pipeline_mode = #tpu.pipeline_mode<synchronous>, transform_indices = @transform_3, window_bounds = array<i64: 1, 128>}, {pipeline_mode = #tpu.pipeline_mode<synchronous>, transform_indices = @transform_4, window_bounds = array<i64: 1, 128>}, {pipeline_mode = #tpu.pipeline_mode<synchronous>, transform_indices = @transform_5, window_bounds = array<i64: 1, 128>}, {transform_indices = @transform_6, window_bounds = array<i64: 64, 128>}]} {
    %c0 = arith.constant 0 : index
    %c0_0 = arith.constant 0 : index
    %0 = vector.load %arg1[%c0, %c0_0] : memref<64x128xf32, #tpu.memory_space<vmem>>, vector<64x128xf32>
    %1 = arith.truncf %0 : vector<64x128xf32> to vector<64x128xbf16>
    %c0_1 = arith.constant 0 : index
    %c0_2 = arith.constant 0 : index
    %2 = vector.load %arg2[%c0_1, %c0_2] : memref<128x512xbf16, #tpu.memory_space<vmem>>, vector<128x128xbf16>
    %cst = arith.constant dense<0.000000e+00> : vector<64x128xf32>
    %3 = tpu.matmul %1, %2, %cst {dimension_numbers = #tpu.dot_dimension_numbers<[1], [0], [0], [1], [0, 0, 1, 1], [], []>} : vector<64x128xbf16>, vector<128x128xbf16>, vector<64x128xf32> -> vector<64x128xf32>
    %c0_3 = arith.constant 0 : index
    %c0_4 = arith.constant 0 : index
    %4 = vector.load %arg3[%c0_3, %c0_4] : memref<1x512xf32, #tpu.memory_space<vmem>>, vector<1x128xf32>
    %5 = vector.broadcast %4 : vector<1x128xf32> to vector<64x128xf32>
    %6 = arith.addf %3, %5 : vector<64x128xf32>
    %7 = arith.negf %6 : vector<64x128xf32>
    %8 = math.exp %7 : vector<64x128xf32>
    %cst_5 = arith.constant 1.000000e+00 : f32
    %9 = vector.broadcast %cst_5 : f32 to vector<64x128xf32>
    %10 = arith.addf %9, %8 : vector<64x128xf32>
    %11 = arith.divf %9, %10 : vector<64x128xf32>
    %c0_6 = arith.constant 0 : index
    %c128 = arith.constant 128 : index
    %12 = vector.load %arg2[%c0_6, %c128] : memref<128x512xbf16, #tpu.memory_space<vmem>>, vector<128x128xbf16>
    %cst_7 = arith.constant dense<0.000000e+00> : vector<64x128xf32>
    %13 = tpu.matmul %1, %12, %cst_7 {dimension_numbers = #tpu.dot_dimension_numbers<[1], [0], [0], [1], [0, 0, 1, 1], [], []>} : vector<64x128xbf16>, vector<128x128xbf16>, vector<64x128xf32> -> vector<64x128xf32>
    %c0_8 = arith.constant 0 : index
    %c128_9 = arith.constant 128 : index
    %14 = vector.load %arg3[%c0_8, %c128_9] : memref<1x512xf32, #tpu.memory_space<vmem>>, vector<1x128xf32>
    %15 = vector.broadcast %14 : vector<1x128xf32> to vector<64x128xf32>
    %16 = arith.addf %13, %15 : vector<64x128xf32>
    %17 = arith.negf %16 : vector<64x128xf32>
    %18 = math.exp %17 : vector<64x128xf32>
    %cst_10 = arith.constant 1.000000e+00 : f32
    %19 = vector.broadcast %cst_10 : f32 to vector<64x128xf32>
    %20 = arith.addf %19, %18 : vector<64x128xf32>
    %21 = arith.divf %19, %20 : vector<64x128xf32>
    %c0_11 = arith.constant 0 : index
    %c0_12 = arith.constant 0 : index
    %22 = vector.load %arg4[%c0_11, %c0_12] : memref<1x128xf32, #tpu.memory_space<vmem>>, vector<1x128xf32>
    %23 = vector.broadcast %22 : vector<1x128xf32> to vector<64x128xf32>
    %24 = arith.mulf %23, %21 : vector<64x128xf32>
    %25 = math.exp %24 : vector<64x128xf32>
    %c0_13 = arith.constant 0 : index
    %c256 = arith.constant 256 : index
    %26 = vector.load %arg2[%c0_13, %c256] : memref<128x512xbf16, #tpu.memory_space<vmem>>, vector<128x128xbf16>
    %cst_14 = arith.constant dense<0.000000e+00> : vector<64x128xf32>
    %27 = tpu.matmul %1, %26, %cst_14 {dimension_numbers = #tpu.dot_dimension_numbers<[1], [0], [0], [1], [0, 0, 1, 1], [], []>} : vector<64x128xbf16>, vector<128x128xbf16>, vector<64x128xf32> -> vector<64x128xf32>
    %c0_15 = arith.constant 0 : index
    %c256_16 = arith.constant 256 : index
    %28 = vector.load %arg3[%c0_15, %c256_16] : memref<1x512xf32, #tpu.memory_space<vmem>>, vector<1x128xf32>
    %29 = vector.broadcast %28 : vector<1x128xf32> to vector<64x128xf32>
    %30 = arith.addf %27, %29 : vector<64x128xf32>
    %31 = math.tanh %30 : vector<64x128xf32>
    %32 = arith.mulf %11, %31 : vector<64x128xf32>
    %33 = arith.mulf %32, %25 : vector<64x128xf32>
    %c0_17 = arith.constant 0 : index
    %c384 = arith.constant 384 : index
    %34 = vector.load %arg2[%c0_17, %c384] : memref<128x512xbf16, #tpu.memory_space<vmem>>, vector<128x128xbf16>
    %cst_18 = arith.constant dense<0.000000e+00> : vector<64x128xf32>
    %35 = tpu.matmul %1, %34, %cst_18 {dimension_numbers = #tpu.dot_dimension_numbers<[1], [0], [0], [1], [0, 0, 1, 1], [], []>} : vector<64x128xbf16>, vector<128x128xbf16>, vector<64x128xf32> -> vector<64x128xf32>
    %c0_19 = arith.constant 0 : index
    %c384_20 = arith.constant 384 : index
    %36 = vector.load %arg3[%c0_19, %c384_20] : memref<1x512xf32, #tpu.memory_space<vmem>>, vector<1x128xf32>
    %37 = vector.broadcast %36 : vector<1x128xf32> to vector<64x128xf32>
    %38 = arith.addf %35, %37 : vector<64x128xf32>
    %39 = arith.negf %38 : vector<64x128xf32>
    %40 = math.exp %39 : vector<64x128xf32>
    %cst_21 = arith.constant 1.000000e+00 : f32
    %41 = vector.broadcast %cst_21 : f32 to vector<64x128xf32>
    %42 = arith.addf %41, %40 : vector<64x128xf32>
    %43 = arith.divf %41, %42 : vector<64x128xf32>
    %44 = math.tanh %33 : vector<64x128xf32>
    %45 = arith.mulf %43, %44 : vector<64x128xf32>
    %cst_22 = arith.constant dense<0.000000e+00> : vector<64xf32>
    %46 = vector.multi_reduction <add>, %45, %cst_22 [1] : vector<64x128xf32> to vector<64xf32>
    %47 = vector.shape_cast %46 : vector<64xf32> to vector<64x1xf32>
    %cst_23 = arith.constant 1.280000e+02 : f32
    %48 = vector.broadcast %cst_23 : f32 to vector<64x1xf32>
    %49 = arith.divf %47, %48 : vector<64x1xf32>
    %50 = vector.broadcast %49 : vector<64x1xf32> to vector<64x128xf32>
    %51 = arith.subf %45, %50 : vector<64x128xf32>
    %52 = arith.mulf %51, %51 : vector<64x128xf32>
    %cst_24 = arith.constant dense<0.000000e+00> : vector<64xf32>
    %53 = vector.multi_reduction <add>, %52, %cst_24 [1] : vector<64x128xf32> to vector<64xf32>
    %54 = vector.shape_cast %53 : vector<64xf32> to vector<64x1xf32>
    %cst_25 = arith.constant 1.280000e+02 : f32
    %55 = vector.broadcast %cst_25 : f32 to vector<64x1xf32>
    %56 = arith.divf %54, %55 : vector<64x1xf32>
    %cst_26 = arith.constant 0.000000e+00 : f32
    %57 = vector.broadcast %cst_26 : f32 to vector<64x1xf32>
    %58 = arith.maximumf %56, %57 : vector<64x1xf32>
    %cst_27 = arith.constant 9.99999974E-6 : f32
    %59 = vector.broadcast %cst_27 : f32 to vector<64x1xf32>
    %60 = arith.addf %58, %59 : vector<64x1xf32>
    %61 = math.rsqrt %60 : vector<64x1xf32>
    %62 = vector.broadcast %61 : vector<64x1xf32> to vector<64x128xf32>
    %63 = arith.mulf %51, %62 : vector<64x128xf32>
    %c0_28 = arith.constant 0 : index
    %c0_29 = arith.constant 0 : index
    %64 = vector.load %arg5[%c0_28, %c0_29] : memref<1x128xf32, #tpu.memory_space<vmem>>, vector<1x128xf32>
    %65 = vector.broadcast %64 : vector<1x128xf32> to vector<64x128xf32>
    %66 = arith.mulf %63, %65 : vector<64x128xf32>
    %c0_30 = arith.constant 0 : index
    %c0_31 = arith.constant 0 : index
    %67 = vector.load %arg6[%c0_30, %c0_31] : memref<1x128xf32, #tpu.memory_space<vmem>>, vector<1x128xf32>
    %68 = vector.broadcast %67 : vector<1x128xf32> to vector<64x128xf32>
    %69 = arith.addf %66, %68 : vector<64x128xf32>
    %c0_32 = arith.constant 0 : index
    %c0_33 = arith.constant 0 : index
    %70 = vector.load %arg7[%c0_32, %c0_33] : memref<64x128xf32, #tpu.memory_space<vmem>>, vector<64x128xf32>
    tpu.vector_store %arg7[%c0_32, %c0_33], %69 {strides = array<i32>} : memref<64x128xf32, #tpu.memory_space<vmem>>, vector<64x128xf32>,
    return
  }
  func.func @transform_0(%arg0: i32) -> (i32, i32) {
    %c0_i32 = arith.constant 0 : i32
    %c0_i32_0 = arith.constant 0 : i32
    return %arg0, %c0_i32 : i32, i32
  }
  func.func @transform_1(%arg0: i32) -> (i32, i32) {
    %c0_i32 = arith.constant 0 : i32
    %c0_i32_0 = arith.constant 0 : i32
    %c0_i32_1 = arith.constant 0 : i32
    return %c0_i32, %c0_i32_0 : i32, i32
  }
  func.func @transform_2(%arg0: i32) -> (i32, i32) {
    %c0_i32 = arith.constant 0 : i32
    %c0_i32_0 = arith.constant 0 : i32
    %c0_i32_1 = arith.constant 0 : i32
    return %c0_i32, %c0_i32_0 : i32, i32
  }
  func.func @transform_3(%arg0: i32) -> (i32, i32) {
    %c0_i32 = arith.constant 0 : i32
    %c0_i32_0 = arith.constant 0 : i32
    %c0_i32_1 = arith.constant 0 : i32
    return %c0_i32, %c0_i32_0 : i32, i32
  }
  func.func @transform_4(%arg0: i32) -> (i32, i32) {
    %c0_i32 = arith.constant 0 : i32
    %c0_i32_0 = arith.constant 0 : i32
    %c0_i32_1 = arith.constant 0 : i32
    return %c0_i32, %c0_i32_0 : i32, i32
  }
  func.func @transform_5(%arg0: i32) -> (i32, i32) {
    %c0_i32 = arith.constant 0 : i32
    %c0_i32_0 = arith.constant 0 : i32
    %c0_i32_1 = arith.constant 0 : i32
    return %c0_i32, %c0_i32_0 : i32, i32
  }
  func.func @transform_6(%arg0: i32) -> (i32, i32) {
    %c0_i32 = arith.constant 0 : i32
    %c0_i32_0 = arith.constant 0 : i32
    return %arg0, %c0_i32 : i32, i32
  }
}

</mosaic_0001>

<llo_original>
// kernel: tpu_custom_call.1
$region0: #{tpu_custom_call.1}
  #allocation0 [shape = 'u32[]', space=smem, size = 0x4, offset = 0x4, fixed_abs, tag = 'smem constant byte address 0x4 - core index']
  #allocation1 [shape = 'u32[72,128]{1,0:T(1,128)}', space=vmem, size = 0x9000, scoped, tag = 'internal scratch']
  %s0 = inlined_call_operand.hbm [shape: f32[128,128], index: 0, kind: input, shape index: {}]
  %s1 = inlined_call_operand.hbm [shape: bf16[128,512], index: 1, kind: input, shape index: {}]
  %s2 = inlined_call_operand.hbm [shape: f32[1,512], index: 2, kind: input, shape index: {}]
  %s3 = inlined_call_operand.vmem [shape: f32[1,128], index: 3, kind: input, shape index: {}]
  %s4 = inlined_call_operand.vmem [shape: f32[1,128], index: 4, kind: input, shape index: {}]
  %s5 = inlined_call_operand.vmem [shape: f32[1,128], index: 5, kind: input, shape index: {}]
  %s6 = inlined_call_operand.hbm [shape: f32[128,128], index: 6, kind: output, shape index: {}]
  %s7 = sld [smem:[#allocation0]]
  $region69: #{tpu_custom_call.1} parent=0
    _
  %s9 = ssub.s32 1, %s7
  %s10 = scalar_select 0, %s9, %s7
  $region1: #{tpu_custom_call.1} parent=0
    #allocation2 [shape = 'u8[65536]{0}', space=vmem, size = 0x10000, scoped, tag = 'input window, operand 0']
    #allocation3 [shape = 's32[2]{0}', space=sflag, size = 0x8, scoped, tag = 'scoped memory for tpu_custom_call.1']
    #allocation4 [shape = 's32[2]{0}', space=sflag, size = 0x8, scoped, tag = 'scoped memory for tpu_custom_call.1']
    #allocation5 [shape = 'u8[131072]{0}', space=vmem, size = 0x20000, scoped, tag = 'input window, operand 1, single buffered']
    #allocation6 [shape = 's32[1]{0}', space=sflag, size = 0x4, scoped, tag = 'scoped memory for tpu_custom_call.1']
    #allocation7 [shape = 'u8[2048]{0}', space=vmem, size = 0x800, scoped, tag = 'input window, operand 2, single buffered']
    #allocation8 [shape = 'u8[65536]{0}', space=vmem, size = 0x10000, scoped, tag = 'output window, operand 0']
    %11 = vsyncpa [#allocation3], 0
    %s12 = scalar_lea.sflag [#allocation3], 1
    %13 = vsyncpa %s12, 0
    %14 = vsyncpa [#allocation6], 0
    %15 = vsyncpa [#allocation4], 0
    %s16 = scalar_lea.sflag [#allocation4], 1
    %17 = vsyncpa %s16, 0
    loop: start=0, step=1, limit=4
    $region2: #{tpu_custom_call.1} parent=1 // loop_pre_header
      _
    $region3: #{tpu_custom_call.1} parent=1 // loop_header
      %s19 = sphi 0, %s23
      %p20 = scmp.ge.s32.totalorder %s19, 4
      %s29 = sphi 0, %s31
      %s32 = sphi 0, %s29
      %s33 = sphi 0, %s32
      %s49 = sphi 0, %s33
      %s53 = sphi 0, %s53
      %s55 = sphi 0, %s53
      %s56 = sphi 0, %s55
      %s70 = sphi 0, %s56
      %s74 = sphi 0, %s74
      %s76 = sphi 0, %s74
      %s77 = sphi 0, %s76
      %s91 = sphi 0, %s77
      %s95 = sphi 0, %s95
      %s97 = sphi 0, %s95
      %s98 = sphi 0, %s97
      %s112 = sphi 0, %s98
      %s116 = sphi 0, %s116
      %s118 = sphi 0, %s116
      %s119 = sphi 0, %s118
      %s133 = sphi 0, %s119
      %s137 = sphi 0, %s137
      %s139 = sphi 0, %s137
      %s140 = sphi 0, %s139
      %s154 = sphi 0, %s140
      %s160 = sphi 0, %s162
      %s163 = sphi 0, %s160
      %s164 = sphi 0, %s163
      %s180 = sphi 0, %s164
    $region4: #{tpu_custom_call.1} parent=1 // loop_header_branch
      %22 = sbr.rel (%p20) target = $region8
    $region5: #{tpu_custom_call.1} parent=1 // loop_body
      %s24 = ssub.s32 %s19, 1
      %s25 = ssub.s32 %s19, 2
      %s26 = sadd.s32 %s19, 1
      %s27 = ssub.s32 %s19, %s26
      %p28 = scmp.eq.s32.totalorder %s27, 0
      %s30 = sadd.s32 %s29, 1
      %s31 = scalar_select %p28, %s29, %s30
      %p34 = pneg %p28
      %p35 = scmp.eq.s32.totalorder %s19, 1
      %p36 = por %p34, %p35
      %p37 = scmp.ne.s32.totalorder %s29, %s32
      %p38 = scmp.eq.s32.totalorder %s19, 0
      %p39 = por %p37, %p38
      %p40 = scmp.ne.s32.totalorder %s29, %s32
      %p41 = scmp.eq.s32.totalorder %s24, 1
      %p42 = por %p40, %p41
      %p43 = scmp.ne.s32.totalorder %s32, %s33
      %p44 = scmp.eq.s32.totalorder %s24, 0
      %p45 = por %p43, %p44
      %p46 = scmp.ne.s32.totalorder %s32, %s33
      %p47 = scmp.eq.s32.totalorder %s25, 1
      %p48 = por %p46, %p47
      %p50 = scmp.ne.s32.totalorder %s33, %s49
      %p51 = scmp.eq.s32.totalorder %s25, 0
      %p52 = por %p50, %p51
      %s54 = sadd.s32 %s53, 1
      %p57 = scmp.eq.s32.totalorder %s19, 1
      %p58 = scmp.ne.s32.totalorder %s53, %s55
      %p59 = scmp.eq.s32.totalorder %s19, 0
      %p60 = por %p58, %p59
      %p61 = scmp.ne.s32.totalorder %s53, %s55
      %p62 = scmp.eq.s32.totalorder %s24, 1
      %p63 = por %p61, %p62
      %p64 = scmp.ne.s32.totalorder %s55, %s56
      %p65 = scmp.eq.s32.totalorder %s24, 0
      %p66 = por %p64, %p65
      %p67 = scmp.ne.s32.totalorder %s55, %s56
      %p68 = scmp.eq.s32.totalorder %s25, 1
      %p69 = por %p67, %p68
      %p71 = scmp.ne.s32.totalorder %s56, %s70
      %p72 = scmp.eq.s32.totalorder %s25, 0
      %p73 = por %p71, %p72
      %s75 = sadd.s32 %s74, 1
      %p78 = scmp.eq.s32.totalorder %s19, 1
      %p79 = scmp.ne.s32.totalorder %s74, %s76
      %p80 = scmp.eq.s32.totalorder %s19, 0
      %p81 = por %p79, %p80
      %p82 = scmp.ne.s32.totalorder %s74, %s76
      %p83 = scmp.eq.s32.totalorder %s24, 1
      %p84 = por %p82, %p83
      %p85 = scmp.ne.s32.totalorder %s76, %s77
      %p86 = scmp.eq.s32.totalorder %s24, 0
      %p87 = por %p85, %p86
      %p88 = scmp.ne.s32.totalorder %s76, %s77
      %p89 = scmp.eq.s32.totalorder %s25, 1
      %p90 = por %p88, %p89
      %p92 = scmp.ne.s32.totalorder %s77, %s91
      %p93 = scmp.eq.s32.totalorder %s25, 0
      %p94 = por %p92, %p93
      %s96 = sadd.s32 %s95, 1
      %p99 = scmp.eq.s32.totalorder %s19, 1
      %p100 = scmp.ne.s32.totalorder %s95, %s97
      %p101 = scmp.eq.s32.totalorder %s19, 0
      %p102 = por %p100, %p101
      %p103 = scmp.ne.s32.totalorder %s95, %s97
      %p104 = scmp.eq.s32.totalorder %s24, 1
      %p105 = por %p103, %p104
      %p106 = scmp.ne.s32.totalorder %s97, %s98
      %p107 = scmp.eq.s32.totalorder %s24, 0
      %p108 = por %p106, %p107
      %p109 = scmp.ne.s32.totalorder %s97, %s98
      %p110 = scmp.eq.s32.totalorder %s25, 1
      %p111 = por %p109, %p110
      %p113 = scmp.ne.s32.totalorder %s98, %s112
      %p114 = scmp.eq.s32.totalorder %s25, 0
      %p115 = por %p113, %p114
      %s117 = sadd.s32 %s116, 1
      %p120 = scmp.eq.s32.totalorder %s19, 1
      %p121 = scmp.ne.s32.totalorder %s116, %s118
      %p122 = scmp.eq.s32.totalorder %s19, 0
      %p123 = por %p121, %p122
      %p124 = scmp.ne.s32.totalorder %s116, %s118
      %p125 = scmp.eq.s32.totalorder %s24, 1
      %p126 = por %p124, %p125
      %p127 = scmp.ne.s32.totalorder %s118, %s119
      %p128 = scmp.eq.s32.totalorder %s24, 0
      %p129 = por %p127, %p128
      %p130 = scmp.ne.s32.totalorder %s118, %s119
      %p131 = scmp.eq.s32.totalorder %s25, 1
      %p132 = por %p130, %p131
      %p134 = scmp.ne.s32.totalorder %s119, %s133
      %p135 = scmp.eq.s32.totalorder %s25, 0
      %p136 = por %p134, %p135
      %s138 = sadd.s32 %s137, 1
      %p141 = scmp.eq.s32.totalorder %s19, 1
      %p142 = scmp.ne.s32.totalorder %s137, %s139
      %p143 = scmp.eq.s32.totalorder %s19, 0
      %p144 = por %p142, %p143
      %p145 = scmp.ne.s32.totalorder %s137, %s139
      %p146 = scmp.eq.s32.totalorder %s24, 1
      %p147 = por %p145, %p146
      %p148 = scmp.ne.s32.totalorder %s139, %s140
      %p149 = scmp.eq.s32.totalorder %s24, 0
      %p150 = por %p148, %p149
      %p151 = scmp.ne.s32.totalorder %s139, %s140
      %p152 = scmp.eq.s32.totalorder %s25, 1
      %p153 = por %p151, %p152
      %p155 = scmp.ne.s32.totalorder %s140, %s154
      %p156 = scmp.eq.s32.totalorder %s25, 0
      %p157 = por %p155, %p156
      %s158 = ssub.s32 %s19, %s26
      %p159 = scmp.eq.s32.totalorder %s158, 0
      %s161 = sadd.s32 %s160, 1
      %s162 = scalar_select %p159, %s160, %s161
      %p165 = pneg %p159
      %p166 = scmp.eq.s32.totalorder %s19, 1
      %p167 = por %p165, %p166
      %p168 = scmp.ne.s32.totalorder %s160, %s163
      %p169 = scmp.eq.s32.totalorder %s19, 0
      %p170 = por %p168, %p169
      %p171 = scmp.ne.s32.totalorder %s160, %s163
      %p172 = scmp.eq.s32.totalorder %s24, 1
      %p173 = por %p171, %p172
      %p174 = scmp.ne.s32.totalorder %s163, %s164
      %p175 = scmp.eq.s32.totalorder %s24, 0
      %p176 = por %p174, %p175
      %p177 = scmp.ne.s32.totalorder %s163, %s164
      %p178 = scmp.eq.s32.totalorder %s25, 1
      %p179 = por %p177, %p178
      %p181 = scmp.ne.s32.totalorder %s164, %s180
      %p182 = scmp.eq.s32.totalorder %s25, 0
      %p183 = por %p181, %p182
      %p184 = scmp.le.s32.totalorder 1, %s19
      %p185 = scmp.lt.s32.totalorder %s19, 3
      %p186 = pnand %p184, %p185
      %p187 = pneg %p186
      // Predicated region
      $region9: #{tpu_custom_call.1} parent=5 // pred_check
        _
      $region10: #{tpu_custom_call.1} parent=5 // pred_check_branch
        %189 = sbr.rel (%p186) target = $region12
      $region11: #{tpu_custom_call.1} parent=5 // pred_region
        %s190 = ssub.s32 %s19, 1
        // Predicated region
        $region13: #{tpu_custom_call.1} parent=11 // pred_check
          %p191 = pneg %p66
        $region14: #{tpu_custom_call.1} parent=11 // pred_check_branch
          %193 = sbr.rel (%p191) target = $region16
        $region15: #{tpu_custom_call.1} parent=11 // pred_region
          %195 = vsyncadd [#allocation6], 0
          %s196 = sshll.u32 %s1, 4
          %s197 = int_to_ptr.hbm [resolvable:$true] %s196
          %s198 = sshll.u32 [#allocation5], 4
          %s199 = int_to_ptr.vmem [resolvable:$true] %s198
          %204 = dma.hbm_to_vmem [thread:$0]  %s197, 4096, %s199, [#allocation6], 256, 256, 16
        $region16: #{tpu_custom_call.1} parent=11 // pred_fallthru
          _
        // Predicated region
        $region17: #{tpu_custom_call.1} parent=11 // pred_check
          %p205 = pneg %p87
        $region18: #{tpu_custom_call.1} parent=11 // pred_check_branch
          %207 = sbr.rel (%p205) target = $region20
        $region19: #{tpu_custom_call.1} parent=11 // pred_region
          %209 = vsyncadd [#allocation6], 0
          %s211 = sshll.u32 %s2, 4
          %s212 = int_to_ptr.hbm [resolvable:$true] %s211
          %s213 = sshll.u32 [#allocation7], 4
          %s214 = int_to_ptr.vmem [resolvable:$true] %s213
          %216 = dma.hbm_to_vmem [thread:$0]  %s212, 64, %s214, [#allocation6]
        $region20: #{tpu_custom_call.1} parent=11 // pred_fallthru
          _
        // Predicated region
        $region21: #{tpu_custom_call.1} parent=11 // pred_check
          %p217 = pneg %p108
        $region22: #{tpu_custom_call.1} parent=11 // pred_check_branch
          %219 = sbr.rel (%p217) target = $region24
        $region23: #{tpu_custom_call.1} parent=11 // pred_region
          _
        $region24: #{tpu_custom_call.1} parent=11 // pred_fallthru
          _
        // Predicated region
        $region25: #{tpu_custom_call.1} parent=11 // pred_check
          %p220 = pneg %p129
        $region26: #{tpu_custom_call.1} parent=11 // pred_check_branch
          %222 = sbr.rel (%p220) target = $region28
        $region27: #{tpu_custom_call.1} parent=11 // pred_region
          _
        $region28: #{tpu_custom_call.1} parent=11 // pred_fallthru
          _
        // Predicated region
        $region29: #{tpu_custom_call.1} parent=11 // pred_check
          %p223 = pneg %p150
        $region30: #{tpu_custom_call.1} parent=11 // pred_check_branch
          %225 = sbr.rel (%p223) target = $region32
        $region31: #{tpu_custom_call.1} parent=11 // pred_region
          _
        $region32: #{tpu_custom_call.1} parent=11 // pred_fallthru
          _
      $region12: #{tpu_custom_call.1} parent=5 // pred_fallthru
        _
      %p226 = scmp.lt.s32.totalorder %s19, 2
      // Predicated region
      $region33: #{tpu_custom_call.1} parent=5 // pred_check
        %p227 = pneg %p226
      $region34: #{tpu_custom_call.1} parent=5 // pred_check_branch
        %229 = sbr.rel (%p227) target = $region36
      $region35: #{tpu_custom_call.1} parent=5 // pred_region
        // Predicated region
        $region37: #{tpu_custom_call.1} parent=35 // pred_check
          %p230 = pneg %p39
        $region38: #{tpu_custom_call.1} parent=35 // pred_check_branch
          %232 = sbr.rel (%p230) target = $region40
        $region39: #{tpu_custom_call.1} parent=35 // pred_region
          %s233 = sand.u32 %s29, 1
          %s234 = scalar_lea.sflag [#allocation3], %s233
          %s235 = sand.u32 %s29, 1
          %s236 = smul.addr %s235, 64
          %s237 = scalar_lea.vmem [#allocation2], %s236
          %s238 = smul.u32 8, %s19
          %240 = vsyncadd %s234, 0
          %s241 = smul.addr %s238, 8
          %s242 = scalar_lea.hbm %s0, %s241
          %s243 = sshll.u32 %s242, 4
          %s244 = int_to_ptr.hbm [resolvable:$true] %s243
          %s245 = sshll.u32 %s237, 4
          %s246 = int_to_ptr.vmem [resolvable:$true] %s245
          %251 = dma.hbm_to_vmem [thread:$0]  %s244, 1024, %s246, %s234, 128, 128, 8
        $region40: #{tpu_custom_call.1} parent=35 // pred_fallthru
          _
      $region36: #{tpu_custom_call.1} parent=5 // pred_fallthru
        _
      %p252 = scmp.le.s32.totalorder 1, %s19
      %p253 = scmp.lt.s32.totalorder %s19, 3
      %p254 = pnand %p252, %p253
      %p255 = pneg %p254
      // Predicated region
      $region41: #{tpu_custom_call.1} parent=5 // pred_check
        _
      $region42: #{tpu_custom_call.1} parent=5 // pred_check_branch
        %257 = sbr.rel (%p254) target = $region44
      $region43: #{tpu_custom_call.1} parent=5 // pred_region
        %s258 = ssub.s32 %s19, 1
        %s259 = sand.u32 %s32, 1
        %s260 = scalar_lea.sflag [#allocation3], %s259
        %s261 = sand.u32 %s32, 1
        %s262 = smul.addr %s261, 64
        %s263 = scalar_lea.vmem [#allocation2], %s262
        // Predicated region
        $region45: #{tpu_custom_call.1} parent=43 // pred_check
          %p264 = pneg %p45
        $region46: #{tpu_custom_call.1} parent=43 // pred_check_branch
          %266 = sbr.rel (%p264) target = $region48
        $region47: #{tpu_custom_call.1} parent=43 // pred_region
          %268 = dma.done %s260, 1024
        $region48: #{tpu_custom_call.1} parent=43 // pred_fallthru
          _
        // Predicated region
        $region49: #{tpu_custom_call.1} parent=43 // pred_check
          %p269 = pneg %p66
        $region50: #{tpu_custom_call.1} parent=43 // pred_check_branch
          %271 = sbr.rel (%p269) target = $region52
        $region51: #{tpu_custom_call.1} parent=43 // pred_region
          %273 = dma.done [#allocation6], 4096
        $region52: #{tpu_custom_call.1} parent=43 // pred_fallthru
          _
        // Predicated region
        $region53: #{tpu_custom_call.1} parent=43 // pred_check
          %p274 = pneg %p87
        $region54: #{tpu_custom_call.1} parent=43 // pred_check_branch
          %276 = sbr.rel (%p274) target = $region56
        $region55: #{tpu_custom_call.1} parent=43 // pred_region
          %278 = dma.done [#allocation6], 64
        $region56: #{tpu_custom_call.1} parent=43 // pred_fallthru
          _
        %s279 = sand.u32 %s32, 1
        %s280 = scalar_lea.sflag [#allocation3], %s279
        %s281 = sand.u32 %s32, 1
        %s282 = smul.addr %s281, 64
        %s283 = scalar_lea.vmem [#allocation2], %s282
        %p284 = pneg %p45
        %p285 = pneg %p42
        %p286 = pneg %p66
        %p287 = pneg %p63
        %p288 = pneg %p87
        %p289 = pneg %p84
        %p290 = pneg %p108
        %p291 = pneg %p105
        %p292 = pneg %p129
        %p293 = pneg %p126
        %p294 = pneg %p150
        %p295 = pneg %p147
        %p296 = pneg %p176
        %p297 = pneg %p173
        %s298 = sand.u32 %s163, 1
        %s299 = scalar_lea.sflag [#allocation4], %s298
        %s300 = sand.u32 %s163, 1
        %s301 = smul.addr %s300, 64
        %s302 = scalar_lea.vmem [#allocation8], %s301
        %s303 = smul.u32 8, %s24
        %s304 = smul.u32 8, %s24
        %v305 = vld [vmem:[%s263] sm:$0xff]
        %v306 = vld [vmem:[%s263 + $0x8] sm:$0xff]
        %v307 = vld [vmem:[%s263 + $0x10] sm:$0xff]
        %v308 = vld [vmem:[%s263 + $0x18] sm:$0xff]
        %v309 = vld [vmem:[%s263 + $0x20] sm:$0xff]
        %v310 = vld [vmem:[%s263 + $0x28] sm:$0xff]
        %v311 = vld [vmem:[%s263 + $0x30] sm:$0xff]
        %v312 = vld [vmem:[%s263 + $0x38] sm:$0xff]
        %v313 = vpack.c.bf16 %v306, %v305
        %v314 = vpack.c.bf16 %v308, %v307
        %v315 = vpack.c.bf16 %v310, %v309
        %v316 = vpack.c.bf16 %v312, %v311
        %v317 = vld [vmem:[#allocation5] sm:$0xf]
        %v318 = vld [vmem:[#allocation5 + $0x10] sm:$0xf]
        %v319 = vld [vmem:[#allocation5 + $0x20] sm:$0xf]
        %v320 = vld [vmem:[#allocation5 + $0x30] sm:$0xf]
        %v321 = vld [vmem:[#allocation5 + $0x40] sm:$0xf]
        %v322 = vld [vmem:[#allocation5 + $0x50] sm:$0xf]
        %v323 = vld [vmem:[#allocation5 + $0x60] sm:$0xf]
        %v324 = vld [vmem:[#allocation5 + $0x70] sm:$0xf]
        %v325 = vld [vmem:[#allocation5 + $0x80] sm:$0xf]
        %v326 = vld [vmem:[#allocation5 + $0x90] sm:$0xf]
        %v327 = vld [vmem:[#allocation5 + $0xa0] sm:$0xf]
        %v328 = vld [vmem:[#allocation5 + $0xb0] sm:$0xf]
        %v329 = vld [vmem:[#allocation5 + $0xc0] sm:$0xf]
        %v330 = vld [vmem:[#allocation5 + $0xd0] sm:$0xf]
        %v331 = vld [vmem:[#allocation5 + $0xe0] sm:$0xf]
        %v332 = vld [vmem:[#allocation5 + $0xf0] sm:$0xf]
        %v333 = vld [vmem:[#allocation7] sm:$0x1]
        %v335 = vperm.slane %v333, 0
        %v353 = vunpack.c.l.b16 %v317
        %v354 = vunpack.c.l.b16 %v318
        %v355 = vunpack.c.l.b16 %v319
        %v356 = vunpack.c.l.b16 %v320
        %v357 = vunpack.c.l.b16 %v321
        %v358 = vunpack.c.l.b16 %v322
        %v359 = vunpack.c.l.b16 %v323
        %v360 = vunpack.c.l.b16 %v324
        %v361 = vunpack.c.l.b16 %v325
        %v362 = vunpack.c.l.b16 %v326
        %v363 = vunpack.c.l.b16 %v327
        %v364 = vunpack.c.l.b16 %v328
        %v365 = vunpack.c.l.b16 %v329
        %v366 = vunpack.c.l.b16 %v330
        %v367 = vunpack.c.l.b16 %v331
        %v368 = vunpack.c.l.b16 %v332
        %v369 = vpack.c.b16 %v354, %v353
        %v370 = vpack.c.b16 %v356, %v355
        %v371 = vpack.c.b16 %v358, %v357
        %v372 = vpack.c.b16 %v360, %v359
        %v373 = vpack.c.b16 %v362, %v361
        %v374 = vpack.c.b16 %v364, %v363
        %v375 = vpack.c.b16 %v366, %v365
        %v376 = vpack.c.b16 %v368, %v367
        %385 = vmatpush.bf16.msra.mxu0 %v376
        %386 = vmatpush.bf16.msra.mxu0 %v375
        %387 = vmatpush.bf16.msra.mxu0 %v374
        %388 = vmatpush.bf16.msra.mxu0 %v373
        %389 = vmatpush.bf16.msra.mxu0 %v372
        %390 = vmatpush.bf16.msra.mxu0 %v371
        %391 = vmatpush.bf16.msra.mxu0 %v370
        %392 = vmatpush.bf16.msra.mxu0 %v369
        %393 = vmatmul.bf16.gmra.mxu0 %v313
        %v394 = vpop.f32.mrf.mxu0
        %v395 = vadd.f32 %v335, %v394
        %v396 = vpop.f32.mrf.mxu0
        %v397 = vadd.f32 %v335, %v396
        %398 = vmatmul.bf16.gmra.mxu0 %v314
        %v399 = vpop.f32.mrf.mxu0
        %v400 = vadd.f32 %v335, %v399
        %v401 = vpop.f32.mrf.mxu0
        %v402 = vadd.f32 %v335, %v401
        %403 = vmatmul.bf16.gmra.mxu0 %v315
        %v404 = vpop.f32.mrf.mxu0
        %v405 = vadd.f32 %v335, %v404
        %v406 = vpop.f32.mrf.mxu0
        %v407 = vadd.f32 %v335, %v406
        %408 = vmatmul.bf16.gmra.mxu0 %v316
        %v409 = vpop.f32.mrf.mxu0
        %v410 = vadd.f32 %v335, %v409
        %v411 = vpop.f32.mrf.mxu0
        %v412 = vadd.f32 %v335, %v411
        %413 = vdwg.mxu0
        %v414 = vxor.u32 %v395, 2147483648
        %v415 = vxor.u32 %v397, 2147483648
        %v416 = vxor.u32 %v400, 2147483648
        %v417 = vxor.u32 %v402, 2147483648
        %v418 = vxor.u32 %v405, 2147483648
        %v419 = vxor.u32 %v407, 2147483648
        %v420 = vxor.u32 %v410, 2147483648
        %v421 = vxor.u32 %v412, 2147483648
        %v422 = vmul.f32 %v414, 1.442695
        %v423 = vpow.pop %v422
        %v424 = vmul.f32 %v415, 1.442695
        %v425 = vpow.pop %v424
        %v426 = vmul.f32 %v416, 1.442695
        %v427 = vpow.pop %v426
        %v428 = vmul.f32 %v417, 1.442695
        %v429 = vpow.pop %v428
        %v430 = vmul.f32 %v418, 1.442695
        %v431 = vpow.pop %v430
        %v432 = vmul.f32 %v419, 1.442695
        %v433 = vpow.pop %v432
        %v434 = vmul.f32 %v420, 1.442695
        %v435 = vpow.pop %v434
        %v436 = vmul.f32 %v421, 1.442695
        %v437 = vpow.pop %v436
        %v438 = vadd.f32 %v423, 1.0
        %v439 = vadd.f32 %v425, 1.0
        %v440 = vadd.f32 %v427, 1.0
        %v441 = vadd.f32 %v429, 1.0
        %v442 = vadd.f32 %v431, 1.0
        %v443 = vadd.f32 %v433, 1.0
        %v444 = vadd.f32 %v435, 1.0
        %v445 = vadd.f32 %v437, 1.0
        %v446 = vrcp.pop %v438
        %v447 = vmul.f32 %v438, %v446
        %v448 = vsub.f32 1.0, %v447
        %v449 = vmul.f32 %v446, %v448
        %v450 = vadd.f32 %v446, %v449
        %vm451 = vweird.f32 %v438
        %vm452 = vweird.f32 %v446
        %vm453 = vmor %vm451, %vm452
        %v454 = vsel %vm453, %v446, %v450
        %v455 = vand.u32 2147483647, %v438
        %vm456 = vcmp.eq.f32.partialorder %v455, 8.507059e+37
        %v457 = vand.u32 %v438, 2147483648
        %v458 = vor.u32 1.1754944e-38, %v457
        %v459 = vsel %vm456, %v458, %v454
        %v460 = vmul.f32 1.0, %v459
        %v461 = vrcp.pop %v439
        %v462 = vmul.f32 %v439, %v461
        %v463 = vsub.f32 1.0, %v462
        %v464 = vmul.f32 %v461, %v463
        %v465 = vadd.f32 %v461, %v464
        %vm466 = vweird.f32 %v439
        %vm467 = vweird.f32 %v461
        %vm468 = vmor %vm466, %vm467
        %v469 = vsel %vm468, %v461, %v465
        %v470 = vand.u32 2147483647, %v439
        %vm471 = vcmp.eq.f32.partialorder %v470, 8.507059e+37
        %v472 = vand.u32 %v439, 2147483648
        %v473 = vor.u32 1.1754944e-38, %v472
        %v474 = vsel %vm471, %v473, %v469
        %v475 = vmul.f32 1.0, %v474
        %v476 = vrcp.pop %v440
        %v477 = vmul.f32 %v440, %v476
        %v478 = vsub.f32 1.0, %v477
        %v479 = vmul.f32 %v476, %v478
        %v480 = vadd.f32 %v476, %v479
        %vm481 = vweird.f32 %v440
        %vm482 = vweird.f32 %v476
        %vm483 = vmor %vm481, %vm482
        %v484 = vsel %vm483, %v476, %v480
        %v485 = vand.u32 2147483647, %v440
        %vm486 = vcmp.eq.f32.partialorder %v485, 8.507059e+37
        %v487 = vand.u32 %v440, 2147483648
        %v488 = vor.u32 1.1754944e-38, %v487
        %v489 = vsel %vm486, %v488, %v484
        %v490 = vmul.f32 1.0, %v489
        %v491 = vrcp.pop %v441
        %v492 = vmul.f32 %v441, %v491
        %v493 = vsub.f32 1.0, %v492
        %v494 = vmul.f32 %v491, %v493
        %v495 = vadd.f32 %v491, %v494
        %vm496 = vweird.f32 %v441
        %vm497 = vweird.f32 %v491
        %vm498 = vmor %vm496, %vm497
        %v499 = vsel %vm498, %v491, %v495
        %v500 = vand.u32 2147483647, %v441
        %vm501 = vcmp.eq.f32.partialorder %v500, 8.507059e+37
        %v502 = vand.u32 %v441, 2147483648
        %v503 = vor.u32 1.1754944e-38, %v502
        %v504 = vsel %vm501, %v503, %v499
        %v505 = vmul.f32 1.0, %v504
        %v506 = vrcp.pop %v442
        %v507 = vmul.f32 %v442, %v506
        %v508 = vsub.f32 1.0, %v507
        %v509 = vmul.f32 %v506, %v508
        %v510 = vadd.f32 %v506, %v509
        %vm511 = vweird.f32 %v442
        %vm512 = vweird.f32 %v506
        %vm513 = vmor %vm511, %vm512
        %v514 = vsel %vm513, %v506, %v510
        %v515 = vand.u32 2147483647, %v442
        %vm516 = vcmp.eq.f32.partialorder %v515, 8.507059e+37
        %v517 = vand.u32 %v442, 2147483648
        %v518 = vor.u32 1.1754944e-38, %v517
        %v519 = vsel %vm516, %v518, %v514
        %v520 = vmul.f32 1.0, %v519
        %v521 = vrcp.pop %v443
        %v522 = vmul.f32 %v443, %v521
        %v523 = vsub.f32 1.0, %v522
        %v524 = vmul.f32 %v521, %v523
        %v525 = vadd.f32 %v521, %v524
        %vm526 = vweird.f32 %v443
        %vm527 = vweird.f32 %v521
        %vm528 = vmor %vm526, %vm527
        %v529 = vsel %vm528, %v521, %v525
        %v530 = vand.u32 2147483647, %v443
        %vm531 = vcmp.eq.f32.partialorder %v530, 8.507059e+37
        %v532 = vand.u32 %v443, 2147483648
        %v533 = vor.u32 1.1754944e-38, %v532
        %v534 = vsel %vm531, %v533, %v529
        %v535 = vmul.f32 1.0, %v534
        %v536 = vrcp.pop %v444
        %v537 = vmul.f32 %v444, %v536
        %v538 = vsub.f32 1.0, %v537
        %v539 = vmul.f32 %v536, %v538
        %v540 = vadd.f32 %v536, %v539
        %vm541 = vweird.f32 %v444
        %vm542 = vweird.f32 %v536
        %vm543 = vmor %vm541, %vm542
        %v544 = vsel %vm543, %v536, %v540
        %v545 = vand.u32 2147483647, %v444
        %vm546 = vcmp.eq.f32.partialorder %v545, 8.507059e+37
        %v547 = vand.u32 %v444, 2147483648
        %v548 = vor.u32 1.1754944e-38, %v547
        %v549 = vsel %vm546, %v548, %v544
        %v550 = vmul.f32 1.0, %v549
        %v551 = vrcp.pop %v445
        %v552 = vmul.f32 %v445, %v551
        %v553 = vsub.f32 1.0, %v552
        %v554 = vmul.f32 %v551, %v553
        %v555 = vadd.f32 %v551, %v554
        %vm556 = vweird.f32 %v445
        %vm557 = vweird.f32 %v551
        %vm558 = vmor %vm556, %vm557
        %v559 = vsel %vm558, %v551, %v555
        %v560 = vand.u32 2147483647, %v445
        %vm561 = vcmp.eq.f32.partialorder %v560, 8.507059e+37
        %v562 = vand.u32 %v445, 2147483648
        %v563 = vor.u32 1.1754944e-38, %v562
        %v564 = vsel %vm561, %v563, %v559
        %v565 = vmul.f32 1.0, %v564
        %v566 = vld [vmem:[#allocation5 + $0x4] sm:$0xf]
        %v567 = vld [vmem:[#allocation5 + $0x14] sm:$0xf]
        %v568 = vld [vmem:[#allocation5 + $0x24] sm:$0xf]
        %v569 = vld [vmem:[#allocation5 + $0x34] sm:$0xf]
        %v570 = vld [vmem:[#allocation5 + $0x44] sm:$0xf]
        %v571 = vld [vmem:[#allocation5 + $0x54] sm:$0xf]
        %v572 = vld [vmem:[#allocation5 + $0x64] sm:$0xf]
        %v573 = vld [vmem:[#allocation5 + $0x74] sm:$0xf]
        %v574 = vld [vmem:[#allocation5 + $0x84] sm:$0xf]
        %v575 = vld [vmem:[#allocation5 + $0x94] sm:$0xf]
        %v576 = vld [vmem:[#allocation5 + $0xa4] sm:$0xf]
        %v577 = vld [vmem:[#allocation5 + $0xb4] sm:$0xf]
        %v578 = vld [vmem:[#allocation5 + $0xc4] sm:$0xf]
        %v579 = vld [vmem:[#allocation5 + $0xd4] sm:$0xf]
        %v580 = vld [vmem:[#allocation5 + $0xe4] sm:$0xf]
        %v581 = vld [vmem:[#allocation5 + $0xf4] sm:$0xf]
        %v582 = vld [vmem:[#allocation7 + $0x1] sm:$0x1]
        %v584 = vperm.slane %v582, 0
        %v602 = vunpack.c.l.b16 %v566
        %v603 = vunpack.c.l.b16 %v567
        %v604 = vunpack.c.l.b16 %v568
        %v605 = vunpack.c.l.b16 %v569
        %v606 = vunpack.c.l.b16 %v570
        %v607 = vunpack.c.l.b16 %v571
        %v608 = vunpack.c.l.b16 %v572
        %v609 = vunpack.c.l.b16 %v573
        %v610 = vunpack.c.l.b16 %v574
        %v611 = vunpack.c.l.b16 %v575
        %v612 = vunpack.c.l.b16 %v576
        %v613 = vunpack.c.l.b16 %v577
        %v614 = vunpack.c.l.b16 %v578
        %v615 = vunpack.c.l.b16 %v579
        %v616 = vunpack.c.l.b16 %v580
        %v617 = vunpack.c.l.b16 %v581
        %v618 = vpack.c.b16 %v603, %v602
        %v619 = vpack.c.b16 %v605, %v604
        %v620 = vpack.c.b16 %v607, %v606
        %v621 = vpack.c.b16 %v609, %v608
        %v622 = vpack.c.b16 %v611, %v610
        %v623 = vpack.c.b16 %v613, %v612
        %v624 = vpack.c.b16 %v615, %v614
        %v625 = vpack.c.b16 %v617, %v616
        %634 = vmatpush.bf16.msra.mxu0 %v625
        %635 = vmatpush.bf16.msra.mxu0 %v624
        %636 = vmatpush.bf16.msra.mxu0 %v623
        %637 = vmatpush.bf16.msra.mxu0 %v622
        %638 = vmatpush.bf16.msra.mxu0 %v621
        %639 = vmatpush.bf16.msra.mxu0 %v620
        %640 = vmatpush.bf16.msra.mxu0 %v619
        %641 = vmatpush.bf16.msra.mxu0 %v618
        %642 = vmatmul.bf16.gmra.mxu0 %v313
        %v643 = vpop.f32.mrf.mxu0
        %v644 = vadd.f32 %v584, %v643
        %v645 = vpop.f32.mrf.mxu0
        %v646 = vadd.f32 %v584, %v645
        %647 = vmatmul.bf16.gmra.mxu0 %v314
        %v648 = vpop.f32.mrf.mxu0
        %v649 = vadd.f32 %v584, %v648
        %v650 = vpop.f32.mrf.mxu0
        %v651 = vadd.f32 %v584, %v650
        %652 = vmatmul.bf16.gmra.mxu0 %v315
        %v653 = vpop.f32.mrf.mxu0
        %v654 = vadd.f32 %v584, %v653
        %v655 = vpop.f32.mrf.mxu0
        %v656 = vadd.f32 %v584, %v655
        %657 = vmatmul.bf16.gmra.mxu0 %v316
        %v658 = vpop.f32.mrf.mxu0
        %v659 = vadd.f32 %v584, %v658
        %v660 = vpop.f32.mrf.mxu0
        %v661 = vadd.f32 %v584, %v660
        %662 = vdwg.mxu0
        %v663 = vxor.u32 %v644, 2147483648
        %v664 = vxor.u32 %v646, 2147483648
        %v665 = vxor.u32 %v649, 2147483648
        %v666 = vxor.u32 %v651, 2147483648
        %v667 = vxor.u32 %v654, 2147483648
        %v668 = vxor.u32 %v656, 2147483648
        %v669 = vxor.u32 %v659, 2147483648
        %v670 = vxor.u32 %v661, 2147483648
        %v671 = vmul.f32 %v663, 1.442695
        %v672 = vpow.pop %v671
        %v673 = vmul.f32 %v664, 1.442695
        %v674 = vpow.pop %v673
        %v675 = vmul.f32 %v665, 1.442695
        %v676 = vpow.pop %v675
        %v677 = vmul.f32 %v666, 1.442695
        %v678 = vpow.pop %v677
        %v679 = vmul.f32 %v667, 1.442695
        %v680 = vpow.pop %v679
        %v681 = vmul.f32 %v668, 1.442695
        %v682 = vpow.pop %v681
        %v683 = vmul.f32 %v669, 1.442695
        %v684 = vpow.pop %v683
        %v685 = vmul.f32 %v670, 1.442695
        %v686 = vpow.pop %v685
        %v687 = vadd.f32 %v672, 1.0
        %v688 = vadd.f32 %v674, 1.0
        %v689 = vadd.f32 %v676, 1.0
        %v690 = vadd.f32 %v678, 1.0
        %v691 = vadd.f32 %v680, 1.0
        %v692 = vadd.f32 %v682, 1.0
        %v693 = vadd.f32 %v684, 1.0
        %v694 = vadd.f32 %v686, 1.0
        %v695 = vrcp.pop %v687
        %v696 = vmul.f32 %v687, %v695
        %v697 = vsub.f32 1.0, %v696
        %v698 = vmul.f32 %v695, %v697
        %v699 = vadd.f32 %v695, %v698
        %vm700 = vweird.f32 %v687
        %vm701 = vweird.f32 %v695
        %vm702 = vmor %vm700, %vm701
        %v703 = vsel %vm702, %v695, %v699
        %v704 = vand.u32 2147483647, %v687
        %vm705 = vcmp.eq.f32.partialorder %v704, 8.507059e+37
        %v706 = vand.u32 %v687, 2147483648
        %v707 = vor.u32 1.1754944e-38, %v706
        %v708 = vsel %vm705, %v707, %v703
        %v709 = vmul.f32 1.0, %v708
        %v710 = vrcp.pop %v688
        %v711 = vmul.f32 %v688, %v710
        %v712 = vsub.f32 1.0, %v711
        %v713 = vmul.f32 %v710, %v712
        %v714 = vadd.f32 %v710, %v713
        %vm715 = vweird.f32 %v688
        %vm716 = vweird.f32 %v710
        %vm717 = vmor %vm715, %vm716
        %v718 = vsel %vm717, %v710, %v714
        %v719 = vand.u32 2147483647, %v688
        %vm720 = vcmp.eq.f32.partialorder %v719, 8.507059e+37
        %v721 = vand.u32 %v688, 2147483648
        %v722 = vor.u32 1.1754944e-38, %v721
        %v723 = vsel %vm720, %v722, %v718
        %v724 = vmul.f32 1.0, %v723
        %v725 = vrcp.pop %v689
        %v726 = vmul.f32 %v689, %v725
        %v727 = vsub.f32 1.0, %v726
        %v728 = vmul.f32 %v725, %v727
        %v729 = vadd.f32 %v725, %v728
        %vm730 = vweird.f32 %v689
        %vm731 = vweird.f32 %v725
        %vm732 = vmor %vm730, %vm731
        %v733 = vsel %vm732, %v725, %v729
        %v734 = vand.u32 2147483647, %v689
        %vm735 = vcmp.eq.f32.partialorder %v734, 8.507059e+37
        %v736 = vand.u32 %v689, 2147483648
        %v737 = vor.u32 1.1754944e-38, %v736
        %v738 = vsel %vm735, %v737, %v733
        %v739 = vmul.f32 1.0, %v738
        %v740 = vrcp.pop %v690
        %v741 = vmul.f32 %v690, %v740
        %v742 = vsub.f32 1.0, %v741
        %v743 = vmul.f32 %v740, %v742
        %v744 = vadd.f32 %v740, %v743
        %vm745 = vweird.f32 %v690
        %vm746 = vweird.f32 %v740
        %vm747 = vmor %vm745, %vm746
        %v748 = vsel %vm747, %v740, %v744
        %v749 = vand.u32 2147483647, %v690
        %vm750 = vcmp.eq.f32.partialorder %v749, 8.507059e+37
        %v751 = vand.u32 %v690, 2147483648
        %v752 = vor.u32 1.1754944e-38, %v751
        %v753 = vsel %vm750, %v752, %v748
        %v754 = vmul.f32 1.0, %v753
        %v755 = vrcp.pop %v691
        %v756 = vmul.f32 %v691, %v755
        %v757 = vsub.f32 1.0, %v756
        %v758 = vmul.f32 %v755, %v757
        %v759 = vadd.f32 %v755, %v758
        %vm760 = vweird.f32 %v691
        %vm761 = vweird.f32 %v755
        %vm762 = vmor %vm760, %vm761
        %v763 = vsel %vm762, %v755, %v759
        %v764 = vand.u32 2147483647, %v691
        %vm765 = vcmp.eq.f32.partialorder %v764, 8.507059e+37
        %v766 = vand.u32 %v691, 2147483648
        %v767 = vor.u32 1.1754944e-38, %v766
        %v768 = vsel %vm765, %v767, %v763
        %v769 = vmul.f32 1.0, %v768
        %v770 = vrcp.pop %v692
        %v771 = vmul.f32 %v692, %v770
        %v772 = vsub.f32 1.0, %v771
        %v773 = vmul.f32 %v770, %v772
        %v774 = vadd.f32 %v770, %v773
        %vm775 = vweird.f32 %v692
        %vm776 = vweird.f32 %v770
        %vm777 = vmor %vm775, %vm776
        %v778 = vsel %vm777, %v770, %v774
        %v779 = vand.u32 2147483647, %v692
        %vm780 = vcmp.eq.f32.partialorder %v779, 8.507059e+37
        %v781 = vand.u32 %v692, 2147483648
        %v782 = vor.u32 1.1754944e-38, %v781
        %v783 = vsel %vm780, %v782, %v778
        %v784 = vmul.f32 1.0, %v783
        %v785 = vrcp.pop %v693
        %v786 = vmul.f32 %v693, %v785
        %v787 = vsub.f32 1.0, %v786
        %v788 = vmul.f32 %v785, %v787
        %v789 = vadd.f32 %v785, %v788
        %vm790 = vweird.f32 %v693
        %vm791 = vweird.f32 %v785
        %vm792 = vmor %vm790, %vm791
        %v793 = vsel %vm792, %v785, %v789
        %v794 = vand.u32 2147483647, %v693
        %vm795 = vcmp.eq.f32.partialorder %v794, 8.507059e+37
        %v796 = vand.u32 %v693, 2147483648
        %v797 = vor.u32 1.1754944e-38, %v796
        %v798 = vsel %vm795, %v797, %v793
        %v799 = vmul.f32 1.0, %v798
        %v800 = vrcp.pop %v694
        %v801 = vmul.f32 %v694, %v800
        %v802 = vsub.f32 1.0, %v801
        %v803 = vmul.f32 %v800, %v802
        %v804 = vadd.f32 %v800, %v803
        %vm805 = vweird.f32 %v694
        %vm806 = vweird.f32 %v800
        %vm807 = vmor %vm805, %vm806
        %v808 = vsel %vm807, %v800, %v804
        %v809 = vand.u32 2147483647, %v694
        %vm810 = vcmp.eq.f32.partialorder %v809, 8.507059e+37
        %v811 = vand.u32 %v694, 2147483648
        %v812 = vor.u32 1.1754944e-38, %v811
        %v813 = vsel %vm810, %v812, %v808
        %v814 = vmul.f32 1.0, %v813
        %v815 = vld [vmem:[%s3] sm:$0x1]
        %v817 = vperm.slane %v815, 0
        %v819 = vmul.f32 %v817, %v709
        %v820 = vmul.f32 %v817, %v724
        %v821 = vmul.f32 %v817, %v739
        %v822 = vmul.f32 %v817, %v754
        %v823 = vmul.f32 %v817, %v769
        %v824 = vmul.f32 %v817, %v784
        %v825 = vmul.f32 %v817, %v799
        %v826 = vmul.f32 %v817, %v814
        %v827 = vmul.f32 %v819, 1.442695
        %v828 = vpow.pop %v827
        %v829 = vmul.f32 %v820, 1.442695
        %v830 = vpow.pop %v829
        %v831 = vmul.f32 %v821, 1.442695
        %v832 = vpow.pop %v831
        %v833 = vmul.f32 %v822, 1.442695
        %v834 = vpow.pop %v833
        %v835 = vmul.f32 %v823, 1.442695
        %v836 = vpow.pop %v835
        %v837 = vmul.f32 %v824, 1.442695
        %v838 = vpow.pop %v837
        %v839 = vmul.f32 %v825, 1.442695
        %v840 = vpow.pop %v839
        %v841 = vmul.f32 %v826, 1.442695
        %v842 = vpow.pop %v841
        %v843 = vld [vmem:[#allocation5 + $0x8] sm:$0xf]
        %v844 = vld [vmem:[#allocation5 + $0x18] sm:$0xf]
        %v845 = vld [vmem:[#allocation5 + $0x28] sm:$0xf]
        %v846 = vld [vmem:[#allocation5 + $0x38] sm:$0xf]
        %v847 = vld [vmem:[#allocation5 + $0x48] sm:$0xf]
        %v848 = vld [vmem:[#allocation5 + $0x58] sm:$0xf]
        %v849 = vld [vmem:[#allocation5 + $0x68] sm:$0xf]
        %v850 = vld [vmem:[#allocation5 + $0x78] sm:$0xf]
        %v851 = vld [vmem:[#allocation5 + $0x88] sm:$0xf]
        %v852 = vld [vmem:[#allocation5 + $0x98] sm:$0xf]
        %v853 = vld [vmem:[#allocation5 + $0xa8] sm:$0xf]
        %v854 = vld [vmem:[#allocation5 + $0xb8] sm:$0xf]
        %v855 = vld [vmem:[#allocation5 + $0xc8] sm:$0xf]
        %v856 = vld [vmem:[#allocation5 + $0xd8] sm:$0xf]
        %v857 = vld [vmem:[#allocation5 + $0xe8] sm:$0xf]
        %v858 = vld [vmem:[#allocation5 + $0xf8] sm:$0xf]
        %v859 = vld [vmem:[#allocation7 + $0x2] sm:$0x1]
        %v861 = vperm.slane %v859, 0
        %v879 = vunpack.c.l.b16 %v843
        %v880 = vunpack.c.l.b16 %v844
        %v881 = vunpack.c.l.b16 %v845
        %v882 = vunpack.c.l.b16 %v846
        %v883 = vunpack.c.l.b16 %v847
        %v884 = vunpack.c.l.b16 %v848
        %v885 = vunpack.c.l.b16 %v849
        %v886 = vunpack.c.l.b16 %v850
        %v887 = vunpack.c.l.b16 %v851
        %v888 = vunpack.c.l.b16 %v852
        %v889 = vunpack.c.l.b16 %v853
        %v890 = vunpack.c.l.b16 %v854
        %v891 = vunpack.c.l.b16 %v855
        %v892 = vunpack.c.l.b16 %v856
        %v893 = vunpack.c.l.b16 %v857
        %v894 = vunpack.c.l.b16 %v858
        %v895 = vpack.c.b16 %v880, %v879
        %v896 = vpack.c.b16 %v882, %v881
        %v897 = vpack.c.b16 %v884, %v883
        %v898 = vpack.c.b16 %v886, %v885
        %v899 = vpack.c.b16 %v888, %v887
        %v900 = vpack.c.b16 %v890, %v889
        %v901 = vpack.c.b16 %v892, %v891
        %v902 = vpack.c.b16 %v894, %v893
        %911 = vmatpush.bf16.msra.mxu0 %v902
        %912 = vmatpush.bf16.msra.mxu0 %v901
        %913 = vmatpush.bf16.msra.mxu0 %v900
        %914 = vmatpush.bf16.msra.mxu0 %v899
        %915 = vmatpush.bf16.msra.mxu0 %v898
        %916 = vmatpush.bf16.msra.mxu0 %v897
        %917 = vmatpush.bf16.msra.mxu0 %v896
        %918 = vmatpush.bf16.msra.mxu0 %v895
        %919 = vmatmul.bf16.gmra.mxu0 %v313
        %v920 = vpop.f32.mrf.mxu0
        %v921 = vadd.f32 %v861, %v920
        %v922 = vpop.f32.mrf.mxu0
        %v923 = vadd.f32 %v861, %v922
        %924 = vmatmul.bf16.gmra.mxu0 %v314
        %v925 = vpop.f32.mrf.mxu0
        %v926 = vadd.f32 %v861, %v925
        %v927 = vpop.f32.mrf.mxu0
        %v928 = vadd.f32 %v861, %v927
        %929 = vmatmul.bf16.gmra.mxu0 %v315
        %v930 = vpop.f32.mrf.mxu0
        %v931 = vadd.f32 %v861, %v930
        %v932 = vpop.f32.mrf.mxu0
        %v933 = vadd.f32 %v861, %v932
        %934 = vmatmul.bf16.gmra.mxu0 %v316
        %v935 = vpop.f32.mrf.mxu0
        %v936 = vadd.f32 %v861, %v935
        %v937 = vpop.f32.mrf.mxu0
        %v938 = vadd.f32 %v861, %v937
        %939 = vdwg.mxu0
        %v940 = vtanh.pop %v921
        %v941 = vtanh.pop %v923
        %v942 = vtanh.pop %v926
        %v943 = vtanh.pop %v928
        %v944 = vtanh.pop %v931
        %v945 = vtanh.pop %v933
        %v946 = vtanh.pop %v936
        %v947 = vtanh.pop %v938
        %v948 = vmul.f32 %v460, %v940
        %v949 = vmul.f32 %v475, %v941
        %v950 = vmul.f32 %v490, %v942
        %v951 = vmul.f32 %v505, %v943
        %v952 = vmul.f32 %v520, %v944
        %v953 = vmul.f32 %v535, %v945
        %v954 = vmul.f32 %v550, %v946
        %v955 = vmul.f32 %v565, %v947
        %v956 = vmul.f32 %v948, %v828
        %v957 = vmul.f32 %v949, %v830
        %v958 = vmul.f32 %v950, %v832
        %v959 = vmul.f32 %v951, %v834
        %v960 = vmul.f32 %v952, %v836
        %v961 = vmul.f32 %v953, %v838
        %v962 = vmul.f32 %v954, %v840
        %v963 = vmul.f32 %v955, %v842
        %v964 = vld [vmem:[#allocation5 + $0xc] sm:$0xf]
        %v965 = vld [vmem:[#allocation5 + $0x1c] sm:$0xf]
        %v966 = vld [vmem:[#allocation5 + $0x2c] sm:$0xf]
        %v967 = vld [vmem:[#allocation5 + $0x3c] sm:$0xf]
        %v968 = vld [vmem:[#allocation5 + $0x4c] sm:$0xf]
        %v969 = vld [vmem:[#allocation5 + $0x5c] sm:$0xf]
        %v970 = vld [vmem:[#allocation5 + $0x6c] sm:$0xf]
        %v971 = vld [vmem:[#allocation5 + $0x7c] sm:$0xf]
        %v972 = vld [vmem:[#allocation5 + $0x8c] sm:$0xf]
        %v973 = vld [vmem:[#allocation5 + $0x9c] sm:$0xf]
        %v974 = vld [vmem:[#allocation5 + $0xac] sm:$0xf]
        %v975 = vld [vmem:[#allocation5 + $0xbc] sm:$0xf]
        %v976 = vld [vmem:[#allocation5 + $0xcc] sm:$0xf]
        %v977 = vld [vmem:[#allocation5 + $0xdc] sm:$0xf]
        %v978 = vld [vmem:[#allocation5 + $0xec] sm:$0xf]
        %v979 = vld [vmem:[#allocation5 + $0xfc] sm:$0xf]
        %v980 = vld [vmem:[#allocation7 + $0x3] sm:$0x1]
        %v982 = vperm.slane %v980, 0
        %v1000 = vunpack.c.l.b16 %v964
        %v1001 = vunpack.c.l.b16 %v965
        %v1002 = vunpack.c.l.b16 %v966
        %v1003 = vunpack.c.l.b16 %v967
        %v1004 = vunpack.c.l.b16 %v968
        %v1005 = vunpack.c.l.b16 %v969
        %v1006 = vunpack.c.l.b16 %v970
        %v1007 = vunpack.c.l.b16 %v971
        %v1008 = vunpack.c.l.b16 %v972
        %v1009 = vunpack.c.l.b16 %v973
        %v1010 = vunpack.c.l.b16 %v974
        %v1011 = vunpack.c.l.b16 %v975
        %v1012 = vunpack.c.l.b16 %v976
        %v1013 = vunpack.c.l.b16 %v977
        %v1014 = vunpack.c.l.b16 %v978
        %v1015 = vunpack.c.l.b16 %v979
        %v1016 = vpack.c.b16 %v1001, %v1000
        %v1017 = vpack.c.b16 %v1003, %v1002
        %v1018 = vpack.c.b16 %v1005, %v1004
        %v1019 = vpack.c.b16 %v1007, %v1006
        %v1020 = vpack.c.b16 %v1009, %v1008
        %v1021 = vpack.c.b16 %v1011, %v1010
        %v1022 = vpack.c.b16 %v1013, %v1012
        %v1023 = vpack.c.b16 %v1015, %v1014
        %1032 = vmatpush.bf16.msra.mxu0 %v1023
        %1033 = vmatpush.bf16.msra.mxu0 %v1022
        %1034 = vmatpush.bf16.msra.mxu0 %v1021
        %1035 = vmatpush.bf16.msra.mxu0 %v1020
        %1036 = vmatpush.bf16.msra.mxu0 %v1019
        %1037 = vmatpush.bf16.msra.mxu0 %v1018
        %1038 = vmatpush.bf16.msra.mxu0 %v1017
        %1039 = vmatpush.bf16.msra.mxu0 %v1016
        %1040 = vmatmul.bf16.gmra.mxu0 %v313
        %v1041 = vpop.f32.mrf.mxu0
        %v1042 = vadd.f32 %v982, %v1041
        %v1043 = vpop.f32.mrf.mxu0
        %v1044 = vadd.f32 %v982, %v1043
        %1045 = vmatmul.bf16.gmra.mxu0 %v314
        %v1046 = vpop.f32.mrf.mxu0
        %v1047 = vadd.f32 %v982, %v1046
        %v1048 = vpop.f32.mrf.mxu0
        %v1049 = vadd.f32 %v982, %v1048
        %1050 = vmatmul.bf16.gmra.mxu0 %v315
        %v1051 = vpop.f32.mrf.mxu0
        %v1052 = vadd.f32 %v982, %v1051
        %v1053 = vpop.f32.mrf.mxu0
        %v1054 = vadd.f32 %v982, %v1053
        %1055 = vmatmul.bf16.gmra.mxu0 %v316
        %v1056 = vpop.f32.mrf.mxu0
        %v1057 = vadd.f32 %v982, %v1056
        %v1058 = vpop.f32.mrf.mxu0
        %v1059 = vadd.f32 %v982, %v1058
        %1060 = vdwg.mxu0
        %v1061 = vxor.u32 %v1042, 2147483648
        %v1062 = vxor.u32 %v1044, 2147483648
        %v1063 = vxor.u32 %v1047, 2147483648
        %v1064 = vxor.u32 %v1049, 2147483648
        %v1065 = vxor.u32 %v1052, 2147483648
        %v1066 = vxor.u32 %v1054, 2147483648
        %v1067 = vxor.u32 %v1057, 2147483648
        %v1068 = vxor.u32 %v1059, 2147483648
        %v1069 = vmul.f32 %v1061, 1.442695
        %v1070 = vpow.pop %v1069
        %v1071 = vmul.f32 %v1062, 1.442695
        %v1072 = vpow.pop %v1071
        %v1073 = vmul.f32 %v1063, 1.442695
        %v1074 = vpow.pop %v1073
        %v1075 = vmul.f32 %v1064, 1.442695
        %v1076 = vpow.pop %v1075
        %v1077 = vmul.f32 %v1065, 1.442695
        %v1078 = vpow.pop %v1077
        %v1079 = vmul.f32 %v1066, 1.442695
        %v1080 = vpow.pop %v1079
        %v1081 = vmul.f32 %v1067, 1.442695
        %v1082 = vpow.pop %v1081
        %v1083 = vmul.f32 %v1068, 1.442695
        %v1084 = vpow.pop %v1083
        %v1085 = vadd.f32 %v1070, 1.0
        %v1086 = vadd.f32 %v1072, 1.0
        %v1087 = vadd.f32 %v1074, 1.0
        %v1088 = vadd.f32 %v1076, 1.0
        %v1089 = vadd.f32 %v1078, 1.0
        %v1090 = vadd.f32 %v1080, 1.0
        %v1091 = vadd.f32 %v1082, 1.0
        %v1092 = vadd.f32 %v1084, 1.0
        %v1093 = vrcp.pop %v1085
        %v1094 = vmul.f32 %v1085, %v1093
        %v1095 = vsub.f32 1.0, %v1094
        %v1096 = vmul.f32 %v1093, %v1095
        %v1097 = vadd.f32 %v1093, %v1096
        %vm1098 = vweird.f32 %v1085
        %vm1099 = vweird.f32 %v1093
        %vm1100 = vmor %vm1098, %vm1099
        %v1101 = vsel %vm1100, %v1093, %v1097
        %v1102 = vand.u32 2147483647, %v1085
        %vm1103 = vcmp.eq.f32.partialorder %v1102, 8.507059e+37
        %v1104 = vand.u32 %v1085, 2147483648
        %v1105 = vor.u32 1.1754944e-38, %v1104
        %v1106 = vsel %vm1103, %v1105, %v1101
        %v1107 = vmul.f32 1.0, %v1106
        %v1108 = vrcp.pop %v1086
        %v1109 = vmul.f32 %v1086, %v1108
        %v1110 = vsub.f32 1.0, %v1109
        %v1111 = vmul.f32 %v1108, %v1110
        %v1112 = vadd.f32 %v1108, %v1111
        %vm1113 = vweird.f32 %v1086
        %vm1114 = vweird.f32 %v1108
        %vm1115 = vmor %vm1113, %vm1114
        %v1116 = vsel %vm1115, %v1108, %v1112
        %v1117 = vand.u32 2147483647, %v1086
        %vm1118 = vcmp.eq.f32.partialorder %v1117, 8.507059e+37
        %v1119 = vand.u32 %v1086, 2147483648
        %v1120 = vor.u32 1.1754944e-38, %v1119
        %v1121 = vsel %vm1118, %v1120, %v1116
        %v1122 = vmul.f32 1.0, %v1121
        %v1123 = vrcp.pop %v1087
        %v1124 = vmul.f32 %v1087, %v1123
        %v1125 = vsub.f32 1.0, %v1124
        %v1126 = vmul.f32 %v1123, %v1125
        %v1127 = vadd.f32 %v1123, %v1126
        %vm1128 = vweird.f32 %v1087
        %vm1129 = vweird.f32 %v1123
        %vm1130 = vmor %vm1128, %vm1129
        %v1131 = vsel %vm1130, %v1123, %v1127
        %v1132 = vand.u32 2147483647, %v1087
        %vm1133 = vcmp.eq.f32.partialorder %v1132, 8.507059e+37
        %v1134 = vand.u32 %v1087, 2147483648
        %v1135 = vor.u32 1.1754944e-38, %v1134
        %v1136 = vsel %vm1133, %v1135, %v1131
        %v1137 = vmul.f32 1.0, %v1136
        %v1138 = vrcp.pop %v1088
        %v1139 = vmul.f32 %v1088, %v1138
        %v1140 = vsub.f32 1.0, %v1139
        %v1141 = vmul.f32 %v1138, %v1140
        %v1142 = vadd.f32 %v1138, %v1141
        %vm1143 = vweird.f32 %v1088
        %vm1144 = vweird.f32 %v1138
        %vm1145 = vmor %vm1143, %vm1144
        %v1146 = vsel %vm1145, %v1138, %v1142
        %v1147 = vand.u32 2147483647, %v1088
        %vm1148 = vcmp.eq.f32.partialorder %v1147, 8.507059e+37
        %v1149 = vand.u32 %v1088, 2147483648
        %v1150 = vor.u32 1.1754944e-38, %v1149
        %v1151 = vsel %vm1148, %v1150, %v1146
        %v1152 = vmul.f32 1.0, %v1151
        %v1153 = vrcp.pop %v1089
        %v1154 = vmul.f32 %v1089, %v1153
        %v1155 = vsub.f32 1.0, %v1154
        %v1156 = vmul.f32 %v1153, %v1155
        %v1157 = vadd.f32 %v1153, %v1156
        %vm1158 = vweird.f32 %v1089
        %vm1159 = vweird.f32 %v1153
        %vm1160 = vmor %vm1158, %vm1159
        %v1161 = vsel %vm1160, %v1153, %v1157
        %v1162 = vand.u32 2147483647, %v1089
        %vm1163 = vcmp.eq.f32.partialorder %v1162, 8.507059e+37
        %v1164 = vand.u32 %v1089, 2147483648
        %v1165 = vor.u32 1.1754944e-38, %v1164
        %v1166 = vsel %vm1163, %v1165, %v1161
        %v1167 = vmul.f32 1.0, %v1166
        %v1168 = vrcp.pop %v1090
        %v1169 = vmul.f32 %v1090, %v1168
        %v1170 = vsub.f32 1.0, %v1169
        %v1171 = vmul.f32 %v1168, %v1170
        %v1172 = vadd.f32 %v1168, %v1171
        %vm1173 = vweird.f32 %v1090
        %vm1174 = vweird.f32 %v1168
        %vm1175 = vmor %vm1173, %vm1174
        %v1176 = vsel %vm1175, %v1168, %v1172
        %v1177 = vand.u32 2147483647, %v1090
        %vm1178 = vcmp.eq.f32.partialorder %v1177, 8.507059e+37
        %v1179 = vand.u32 %v1090, 2147483648
        %v1180 = vor.u32 1.1754944e-38, %v1179
        %v1181 = vsel %vm1178, %v1180, %v1176
        %v1182 = vmul.f32 1.0, %v1181
        %v1183 = vrcp.pop %v1091
        %v1184 = vmul.f32 %v1091, %v1183
        %v1185 = vsub.f32 1.0, %v1184
        %v1186 = vmul.f32 %v1183, %v1185
        %v1187 = vadd.f32 %v1183, %v1186
        %vm1188 = vweird.f32 %v1091
        %vm1189 = vweird.f32 %v1183
        %vm1190 = vmor %vm1188, %vm1189
        %v1191 = vsel %vm1190, %v1183, %v1187
        %v1192 = vand.u32 2147483647, %v1091
        %vm1193 = vcmp.eq.f32.partialorder %v1192, 8.507059e+37
        %v1194 = vand.u32 %v1091, 2147483648
        %v1195 = vor.u32 1.1754944e-38, %v1194
        %v1196 = vsel %vm1193, %v1195, %v1191
        %v1197 = vmul.f32 1.0, %v1196
        %v1198 = vrcp.pop %v1092
        %v1199 = vmul.f32 %v1092, %v1198
        %v1200 = vsub.f32 1.0, %v1199
        %v1201 = vmul.f32 %v1198, %v1200
        %v1202 = vadd.f32 %v1198, %v1201
        %vm1203 = vweird.f32 %v1092
        %vm1204 = vweird.f32 %v1198
        %vm1205 = vmor %vm1203, %vm1204
        %v1206 = vsel %vm1205, %v1198, %v1202
        %v1207 = vand.u32 2147483647, %v1092
        %vm1208 = vcmp.eq.f32.partialorder %v1207, 8.507059e+37
        %v1209 = vand.u32 %v1092, 2147483648
        %v1210 = vor.u32 1.1754944e-38, %v1209
        %v1211 = vsel %vm1208, %v1210, %v1206
        %v1212 = vmul.f32 1.0, %v1211
        %v1213 = vtanh.pop %v956
        %v1214 = vtanh.pop %v957
        %v1215 = vtanh.pop %v958
        %v1216 = vtanh.pop %v959
        %v1217 = vtanh.pop %v960
        %v1218 = vtanh.pop %v961
        %v1219 = vtanh.pop %v962
        %v1220 = vtanh.pop %v963
        %v1221 = vmul.f32 %v1107, %v1213
        %v1222 = vmul.f32 %v1122, %v1214
        %v1223 = vmul.f32 %v1137, %v1215
        %v1224 = vmul.f32 %v1152, %v1216
        %v1225 = vmul.f32 %v1167, %v1217
        %v1226 = vmul.f32 %v1182, %v1218
        %v1227 = vmul.f32 %v1197, %v1219
        %v1228 = vmul.f32 %v1212, %v1220
        %1229 = vadd.xlane.f32.xlu0 %v1221
        %v1230 = vpop.xlane.xlu0 %1229
        %1231 = vadd.xlane.f32.xlu0 %v1222
        %v1232 = vpop.xlane.xlu0 %1231
        %1233 = vadd.xlane.f32.xlu0 %v1223
        %v1234 = vpop.xlane.xlu0 %1233
        %1235 = vadd.xlane.f32.xlu0 %v1224
        %v1236 = vpop.xlane.xlu0 %1235
        %1237 = vadd.xlane.f32.xlu0 %v1225
        %v1238 = vpop.xlane.xlu0 %1237
        %1239 = vadd.xlane.f32.xlu0 %v1226
        %v1240 = vpop.xlane.xlu0 %1239
        %1241 = vadd.xlane.f32.xlu0 %v1227
        %v1242 = vpop.xlane.xlu0 %1241
        %1243 = vadd.xlane.f32.xlu0 %v1228
        %v1244 = vpop.xlane.xlu0 %1243
        %v1245 = vrcp.pop 128.0
        %v1246 = vmul.f32 128.0, %v1245
        %v1247 = vsub.f32 1.0, %v1246
        %v1248 = vmul.f32 %v1245, %v1247
        %v1249 = vadd.f32 %v1245, %v1248
        %vm1250 = vweird.f32 %v1245
        %v1251 = vsel %vm1250, %v1245, %v1249
        %v1252 = vmul.f32 %v1230, %v1251
        %v1253 = vmul.f32 %v1232, %v1251
        %v1254 = vmul.f32 %v1234, %v1251
        %v1255 = vmul.f32 %v1236, %v1251
        %v1256 = vmul.f32 %v1238, %v1251
        %v1257 = vmul.f32 %v1240, %v1251
        %v1258 = vmul.f32 %v1242, %v1251
        %v1259 = vmul.f32 %v1244, %v1251
        %v1260 = vsub.f32 %v1221, %v1252
        %v1261 = vsub.f32 %v1222, %v1253
        %v1262 = vsub.f32 %v1223, %v1254
        %v1263 = vsub.f32 %v1224, %v1255
        %v1264 = vsub.f32 %v1225, %v1256
        %v1265 = vsub.f32 %v1226, %v1257
        %v1266 = vsub.f32 %v1227, %v1258
        %v1267 = vsub.f32 %v1228, %v1259
        %v1268 = vmul.f32 %v1260, %v1260
        %v1269 = vmul.f32 %v1261, %v1261
        %v1270 = vmul.f32 %v1262, %v1262
        %v1271 = vmul.f32 %v1263, %v1263
        %v1272 = vmul.f32 %v1264, %v1264
        %v1273 = vmul.f32 %v1265, %v1265
        %v1274 = vmul.f32 %v1266, %v1266
        %v1275 = vmul.f32 %v1267, %v1267
        %1276 = vadd.xlane.f32.xlu0 %v1268
        %v1277 = vpop.xlane.xlu0 %1276
        %1278 = vadd.xlane.f32.xlu0 %v1269
        %v1279 = vpop.xlane.xlu0 %1278
        %1280 = vadd.xlane.f32.xlu0 %v1270
        %v1281 = vpop.xlane.xlu0 %1280
        %1282 = vadd.xlane.f32.xlu0 %v1271
        %v1283 = vpop.xlane.xlu0 %1282
        %1284 = vadd.xlane.f32.xlu0 %v1272
        %v1285 = vpop.xlane.xlu0 %1284
        %1286 = vadd.xlane.f32.xlu0 %v1273
        %v1287 = vpop.xlane.xlu0 %1286
        %1288 = vadd.xlane.f32.xlu0 %v1274
        %v1289 = vpop.xlane.xlu0 %1288
        %1290 = vadd.xlane.f32.xlu0 %v1275
        %v1291 = vpop.xlane.xlu0 %1290
        %v1292 = vmul.f32 %v1277, %v1251
        %v1293 = vmul.f32 %v1279, %v1251
        %v1294 = vmul.f32 %v1281, %v1251
        %v1295 = vmul.f32 %v1283, %v1251
        %v1296 = vmul.f32 %v1285, %v1251
        %v1297 = vmul.f32 %v1287, %v1251
        %v1298 = vmul.f32 %v1289, %v1251
        %v1299 = vmul.f32 %v1291, %v1251
        %v1300 = vmax.f32 %v1292, 0.0
        %v1301 = vmax.f32 %v1293, 0.0
        %v1302 = vmax.f32 %v1294, 0.0
        %v1303 = vmax.f32 %v1295, 0.0
        %v1304 = vmax.f32 %v1296, 0.0
        %v1305 = vmax.f32 %v1297, 0.0
        %v1306 = vmax.f32 %v1298, 0.0
        %v1307 = vmax.f32 %v1299, 0.0
        %v1308 = vadd.f32 %v1300, 1e-05
        %v1309 = vadd.f32 %v1301, 1e-05
        %v1310 = vadd.f32 %v1302, 1e-05
        %v1311 = vadd.f32 %v1303, 1e-05
        %v1312 = vadd.f32 %v1304, 1e-05
        %v1313 = vadd.f32 %v1305, 1e-05
        %v1314 = vadd.f32 %v1306, 1e-05
        %v1315 = vadd.f32 %v1307, 1e-05
        %v1316 = vrsqrt.pop %v1308
        %v1317 = vmul.f32 %v1316, %v1308
        %v1318 = vmul.f32 %v1317, %v1316
        %v1319 = vmul.f32 0.5, %v1318
        %v1320 = vsub.f32 1.5, %v1319
        %v1321 = vmul.f32 %v1316, %v1320
        %vm1322 = vweird.f32 %v1308
        %vm1323 = vweird.f32 %v1316
        %vm1324 = vmor %vm1322, %vm1323
        %v1325 = vsel %vm1324, %v1316, %v1321
        %v1326 = vrsqrt.pop %v1309
        %v1327 = vmul.f32 %v1326, %v1309
        %v1328 = vmul.f32 %v1327, %v1326
        %v1329 = vmul.f32 0.5, %v1328
        %v1330 = vsub.f32 1.5, %v1329
        %v1331 = vmul.f32 %v1326, %v1330
        %vm1332 = vweird.f32 %v1309
        %vm1333 = vweird.f32 %v1326
        %vm1334 = vmor %vm1332, %vm1333
        %v1335 = vsel %vm1334, %v1326, %v1331
        %v1336 = vrsqrt.pop %v1310
        %v1337 = vmul.f32 %v1336, %v1310
        %v1338 = vmul.f32 %v1337, %v1336
        %v1339 = vmul.f32 0.5, %v1338
        %v1340 = vsub.f32 1.5, %v1339
        %v1341 = vmul.f32 %v1336, %v1340
        %vm1342 = vweird.f32 %v1310
        %vm1343 = vweird.f32 %v1336
        %vm1344 = vmor %vm1342, %vm1343
        %v1345 = vsel %vm1344, %v1336, %v1341
        %v1346 = vrsqrt.pop %v1311
        %v1347 = vmul.f32 %v1346, %v1311
        %v1348 = vmul.f32 %v1347, %v1346
        %v1349 = vmul.f32 0.5, %v1348
        %v1350 = vsub.f32 1.5, %v1349
        %v1351 = vmul.f32 %v1346, %v1350
        %vm1352 = vweird.f32 %v1311
        %vm1353 = vweird.f32 %v1346
        %vm1354 = vmor %vm1352, %vm1353
        %v1355 = vsel %vm1354, %v1346, %v1351
        %v1356 = vrsqrt.pop %v1312
        %v1357 = vmul.f32 %v1356, %v1312
        %v1358 = vmul.f32 %v1357, %v1356
        %v1359 = vmul.f32 0.5, %v1358
        %v1360 = vsub.f32 1.5, %v1359
        %v1361 = vmul.f32 %v1356, %v1360
        %vm1362 = vweird.f32 %v1312
        %vm1363 = vweird.f32 %v1356
        %vm1364 = vmor %vm1362, %vm1363
        %v1365 = vsel %vm1364, %v1356, %v1361
        %v1366 = vrsqrt.pop %v1313
        %v1367 = vmul.f32 %v1366, %v1313
        %v1368 = vmul.f32 %v1367, %v1366
        %v1369 = vmul.f32 0.5, %v1368
        %v1370 = vsub.f32 1.5, %v1369
        %v1371 = vmul.f32 %v1366, %v1370
        %vm1372 = vweird.f32 %v1313
        %vm1373 = vweird.f32 %v1366
        %vm1374 = vmor %vm1372, %vm1373
        %v1375 = vsel %vm1374, %v1366, %v1371
        %v1376 = vrsqrt.pop %v1314
        %v1377 = vmul.f32 %v1376, %v1314
        %v1378 = vmul.f32 %v1377, %v1376
        %v1379 = vmul.f32 0.5, %v1378
        %v1380 = vsub.f32 1.5, %v1379
        %v1381 = vmul.f32 %v1376, %v1380
        %vm1382 = vweird.f32 %v1314
        %vm1383 = vweird.f32 %v1376
        %vm1384 = vmor %vm1382, %vm1383
        %v1385 = vsel %vm1384, %v1376, %v1381
        %v1386 = vrsqrt.pop %v1315
        %v1387 = vmul.f32 %v1386, %v1315
        %v1388 = vmul.f32 %v1387, %v1386
        %v1389 = vmul.f32 0.5, %v1388
        %v1390 = vsub.f32 1.5, %v1389
        %v1391 = vmul.f32 %v1386, %v1390
        %vm1392 = vweird.f32 %v1315
        %vm1393 = vweird.f32 %v1386
        %vm1394 = vmor %vm1392, %vm1393
        %v1395 = vsel %vm1394, %v1386, %v1391
        %v1396 = vmul.f32 %v1260, %v1325
        %v1397 = vmul.f32 %v1261, %v1335
        %v1398 = vmul.f32 %v1262, %v1345
        %v1399 = vmul.f32 %v1263, %v1355
        %v1400 = vmul.f32 %v1264, %v1365
        %v1401 = vmul.f32 %v1265, %v1375
        %v1402 = vmul.f32 %v1266, %v1385
        %v1403 = vmul.f32 %v1267, %v1395
        %v1404 = vld [vmem:[%s4] sm:$0x1]
        %v1406 = vperm.slane %v1404, 0
        %v1408 = vmul.f32 %v1396, %v1406
        %v1409 = vmul.f32 %v1397, %v1406
        %v1410 = vmul.f32 %v1398, %v1406
        %v1411 = vmul.f32 %v1399, %v1406
        %v1412 = vmul.f32 %v1400, %v1406
        %v1413 = vmul.f32 %v1401, %v1406
        %v1414 = vmul.f32 %v1402, %v1406
        %v1415 = vmul.f32 %v1403, %v1406
        %v1416 = vld [vmem:[%s5] sm:$0x1]
        %v1418 = vperm.slane %v1416, 0
        %v1420 = vadd.f32 %v1408, %v1418
        %v1421 = vadd.f32 %v1409, %v1418
        %v1422 = vadd.f32 %v1410, %v1418
        %v1423 = vadd.f32 %v1411, %v1418
        %v1424 = vadd.f32 %v1412, %v1418
        %v1425 = vadd.f32 %v1413, %v1418
        %v1426 = vadd.f32 %v1414, %v1418
        %v1427 = vadd.f32 %v1415, %v1418
        %1428 = vst [vmem:[%s302] sm:$0xff] %v1420
        %1429 = vst [vmem:[%s302 + $0x8] sm:$0xff] %v1421
        %1430 = vst [vmem:[%s302 + $0x10] sm:$0xff] %v1422
        %1431 = vst [vmem:[%s302 + $0x18] sm:$0xff] %v1423
        %1432 = vst [vmem:[%s302 + $0x20] sm:$0xff] %v1424
        %1433 = vst [vmem:[%s302 + $0x28] sm:$0xff] %v1425
        %1434 = vst [vmem:[%s302 + $0x30] sm:$0xff] %v1426
        %1435 = vst [vmem:[%s302 + $0x38] sm:$0xff] %v1427
        %s1436 = sand.u32 %s163, 1
        %s1437 = scalar_lea.sflag [#allocation4], %s1436
        %s1438 = sand.u32 %s163, 1
        %s1439 = smul.addr %s1438, 64
        %s1440 = scalar_lea.vmem [#allocation8], %s1439
        // Predicated region
        $region57: #{tpu_custom_call.1} parent=43 // pred_check
          %p1441 = pneg %p173
        $region58: #{tpu_custom_call.1} parent=43 // pred_check_branch
          %1443 = sbr.rel (%p1441) target = $region60
        $region59: #{tpu_custom_call.1} parent=43 // pred_region
          %s1444 = smul.u32 8, %s24
          %1446 = vsyncadd %s1437, 0
          %s1447 = smul.addr %s1444, 8
          %s1448 = scalar_lea.hbm %s6, %s1447
          %s1449 = sshll.u32 %s1440, 4
          %s1450 = int_to_ptr.vmem [resolvable:$true] %s1449
          %s1451 = sshll.u32 %s1448, 4
          %s1452 = int_to_ptr.hbm [resolvable:$true] %s1451
          %1457 = dma.vmem_to_hbm [thread:$0]  %s1450, 1024, %s1452, %s1437, 128, 128, 8
        $region60: #{tpu_custom_call.1} parent=43 // pred_fallthru
          _
      $region44: #{tpu_custom_call.1} parent=5 // pred_fallthru
        _
      %p1458 = scmp.le.s32.totalorder 2, %s19
      // Predicated region
      $region61: #{tpu_custom_call.1} parent=5 // pred_check
        %p1459 = pneg %p1458
      $region62: #{tpu_custom_call.1} parent=5 // pred_check_branch
        %1461 = sbr.rel (%p1459) target = $region64
      $region63: #{tpu_custom_call.1} parent=5 // pred_region
        %s1462 = ssub.s32 %s19, 2
        // Predicated region
        $region65: #{tpu_custom_call.1} parent=63 // pred_check
          %p1463 = pneg %p179
        $region66: #{tpu_custom_call.1} parent=63 // pred_check_branch
          %1465 = sbr.rel (%p1463) target = $region68
        $region67: #{tpu_custom_call.1} parent=63 // pred_region
          %s1466 = sand.u32 %s164, 1
          %s1467 = scalar_lea.sflag [#allocation4], %s1466
          %s1468 = sand.u32 %s164, 1
          %s1469 = smul.addr %s1468, 64
          %s1470 = scalar_lea.vmem [#allocation8], %s1469
          %1472 = dma.done %s1467, 1024
        $region68: #{tpu_custom_call.1} parent=63 // pred_fallthru
          _
      $region64: #{tpu_custom_call.1} parent=5 // pred_fallthru
        _
    $region6: #{tpu_custom_call.1} parent=1 // loop_footer
      %s23 = sadd.s32 1, %s19
    $region7: #{tpu_custom_call.1} parent=1 // loop_footer_branch
      %18 = sbr.rel target = $region3
    $region8: #{tpu_custom_call.1} parent=1 // loop_exit
      _
    %1473 = vsyncpa [#allocation3], 1
    %s1474 = scalar_lea.sflag [#allocation3], 1
    %1475 = vsyncpa %s1474, 1
    %1476 = vsyncpa [#allocation6], 1
    %1477 = vsyncpa [#allocation4], 1
    %s1478 = scalar_lea.sflag [#allocation4], 1
    %1479 = vsyncpa %s1478, 1

</llo_original>
